<compile_context>
chip_gen: v6e
topology: v6e:2x2x1
jax: 0.10.0
libtpu: 0.0.40
codegen_flags: <defaults>
</compile_context>

<pallas_src>
import jax
import jax.numpy as jnp
from jax.experimental import pallas as pl
from jax.experimental.pallas import tpu as pltpu


D_IN = 1536
LAYER_DIMS = [(1536, 400), (400, 150), (150, 64), (64, 1)]
# lane-padded widths used on chip (multiples of 128 where it matters)
PAD = {1536: 1536, 400: 512, 150: 256, 64: 64, 1: 1}


def _round_up(n, m):
    return ((n + m - 1) // m) * m


def mlp_kernel(x_ref, w1_ref, b1_ref, w2_ref, b2_ref, w3_ref, b3_ref,
               w4_ref, b4_ref, o_ref):
    # Layer 1: (TB,1536) @ (1536,512) + (1,512), ReLU
    h = jnp.dot(x_ref[...], w1_ref[...], preferred_element_type=jnp.float32)
    h = jnp.maximum(h + b1_ref[...], 0.0)
    # Layer 2: (TB,512) @ (512,256) + (1,256), ReLU
    h = jnp.dot(h, w2_ref[...], preferred_element_type=jnp.float32)
    h = jnp.maximum(h + b2_ref[...], 0.0)
    # Layer 3: (TB,256) @ (256,64) + (1,64), ReLU
    h = jnp.dot(h, w3_ref[...], preferred_element_type=jnp.float32)
    h = jnp.maximum(h + b3_ref[...], 0.0)
    # Layer 4: (TB,64) @ (64,1) + (1,1), Sigmoid
    logits = jnp.dot(h, w4_ref[...], preferred_element_type=jnp.float32)
    logits = logits + b4_ref[...]
    # sigmoid(x) = 0.5 * (tanh(x/2) + 1): tanh runs on the EUP (free slot),
    # avoids the VPU divide, and is robust for large-magnitude logits.
    o_ref[...] = 0.5 * jnp.tanh(0.5 * logits) + 0.5


def pack_params(params):
    """Zero-pad (in,out)-shaped weights / (1,out) biases to lane-friendly widths.

    Padded columns get weight 0 and bias 0, so their activations are
    relu(0) = 0 and contribute nothing to the next layer: results on the real
    columns are unchanged.
    """
    packed = []
    for (w, b) in params:
        fin, fout = w.shape
        fin_p, fout_p = PAD[fin], PAD[fout]
        w_p = jnp.zeros((fin_p, fout_p), jnp.float32).at[:fin, :fout].set(w)
        b_p = jnp.zeros((1, fout_p), jnp.float32).at[:, :fout].set(b)
        packed += [w_p, b_p]
    return tuple(packed)


def net_forward(x, packed_params, tb=512):
    """x: (B, 1536) f32; packed_params: flat tuple (w1,b1,...,w4,b4), padded."""
    B = x.shape[0]
    # Batch tile: multiples of 8 (sublane), capped at `tb`; pad B up to a
    # whole number of tiles so every block is full-size.
    TB = min(tb, _round_up(B, 8))
    Bp = _round_up(B, TB)
    if Bp != B:
        x = jnp.pad(x, ((0, Bp - B), (0, 0)))

    x_spec = pl.BlockSpec((TB, D_IN), lambda i: (i, 0))
    # Weights / biases: full-array blocks, same block index every grid step
    # -> fetched once, VMEM-resident across all batch tiles.
    param_specs = [pl.BlockSpec(p.shape, lambda i: (0, 0)) for p in packed_params]
    out_spec = pl.BlockSpec((TB, 1), lambda i: (i, 0))

    flops = 2 * Bp * sum(fi * fo for fi, fo in LAYER_DIMS)
    bytes_accessed = 4 * (Bp * D_IN + Bp
                          + sum(int(p.size) for p in packed_params))

    out = pl.pallas_call(
        mlp_kernel,
        out_shape=jax.ShapeDtypeStruct((Bp, 1), jnp.float32),
        grid=(Bp // TB,),
        in_specs=[x_spec] + param_specs,
        out_specs=out_spec,
        compiler_params=pltpu.CompilerParams(
            dimension_semantics=("parallel",),
        ),
        cost_estimate=pl.CostEstimate(
            flops=int(flops),
            transcendentals=int(Bp),
            bytes_accessed=int(bytes_accessed),
        ),
    )(x, *packed_params)
    return out[:B]


def init_params(key):
    """Deterministic init mimicking PyTorch nn.Linear defaults:
    uniform(-1/sqrt(fan_in), 1/sqrt(fan_in)) for weight and bias.
    Weights stored transposed as (in, out)."""
    params = []
    for (fan_in, fan_out) in LAYER_DIMS:
        key, kw, kb = jax.random.split(key, 3)
        bound = 1.0 / jnp.sqrt(fan_in)
        w_t = jax.random.uniform(kw, (fan_in, fan_out), jnp.float32,
                                 minval=-bound, maxval=bound)
        b = jax.random.uniform(kb, (1, fan_out), jnp.float32,
                               minval=-bound, maxval=bound)
        params.append((w_t, b))
    return params


def reference_forward(x, params):
    h = x
    for i, (w, b) in enumerate(params):
        h = h @ w + b
        if i < 3:
            h = jnp.maximum(h, 0.0)
        else:
            h = 1.0 / (1.0 + jnp.exp(-h))
    return h


if __name__ == "__main__":
    key = jax.random.PRNGKey(0)
    key, kx = jax.random.split(key)

    B = 8
    x = jax.random.normal(kx, (B, 1536), jnp.float32)
    params = init_params(key)
    packed = pack_params(params)

    out = net_forward(x, packed)
    out = jax.block_until_ready(out)

    ref = reference_forward(x, params)
    assert out.shape == (B, 1), out.shape
    assert jnp.allclose(out, ref, atol=1e-5, rtol=1e-5), (
        f"max abs err {jnp.max(jnp.abs(out - ref))}")

    print("KERNEL_OK")
</pallas_src>

<mosaic_0001>
module attributes {stable_mosaic.version = 11 : i64} {
  func.func @mlp_kernel(%arg0: i32, %arg1: memref<8x1536xf32, #tpu.memory_space<vmem>>, %arg2: memref<1536x512xf32, #tpu.memory_space<vmem>>, %arg3: memref<1x512xf32, #tpu.memory_space<vmem>>, %arg4: memref<512x256xf32, #tpu.memory_space<vmem>>, %arg5: memref<1x256xf32, #tpu.memory_space<vmem>>, %arg6: memref<256x64xf32, #tpu.memory_space<vmem>>, %arg7: memref<1x64xf32, #tpu.memory_space<vmem>>, %arg8: memref<64x1xf32, #tpu.memory_space<vmem>>, %arg9: memref<1x1xf32, #tpu.memory_space<vmem>>, %arg10: memref<8x1xf32, #tpu.memory_space<vmem>>) attributes {dimension_semantics = [#tpu.dimension_semantics<parallel>], iteration_bounds = array<i64: 1>, scalar_prefetch = 0 : i64, scratch_operands = 0 : i64, tpu.core_type = #tpu.core_type<tc>, window_params = [{transform_indices = @transform_0, window_bounds = array<i64: 8, 1536>}, {pipeline_mode = #tpu.pipeline_mode<synchronous>, transform_indices = @transform_1, window_bounds = array<i64: 1536, 512>}, {pipeline_mode = #tpu.pipeline_mode<synchronous>, transform_indices = @transform_2, window_bounds = array<i64: 1, 512>}, {pipeline_mode = #tpu.pipeline_mode<synchronous>, transform_indices = @transform_3, window_bounds = array<i64: 512, 256>}, {pipeline_mode = #tpu.pipeline_mode<synchronous>, transform_indices = @transform_4, window_bounds = array<i64: 1, 256>}, {pipeline_mode = #tpu.pipeline_mode<synchronous>, transform_indices = @transform_5, window_bounds = array<i64: 256, 64>}, {pipeline_mode = #tpu.pipeline_mode<synchronous>, transform_indices = @transform_6, window_bounds = array<i64: 1, 64>}, {pipeline_mode = #tpu.pipeline_mode<synchronous>, transform_indices = @transform_7, window_bounds = array<i64: 64, 1>}, {pipeline_mode = #tpu.pipeline_mode<synchronous>, transform_indices = @transform_8, window_bounds = array<i64: 1, 1>}, {transform_indices = @transform_9, window_bounds = array<i64: 8, 1>}]} {
    %c0 = arith.constant 0 : index
    %c0_0 = arith.constant 0 : index
    %0 = vector.load %arg1[%c0, %c0_0] : memref<8x1536xf32, #tpu.memory_space<vmem>>, vector<8x1536xf32>
    %c0_1 = arith.constant 0 : index
    %c0_2 = arith.constant 0 : index
    %1 = vector.load %arg2[%c0_1, %c0_2] : memref<1536x512xf32, #tpu.memory_space<vmem>>, vector<1536x512xf32>
    %cst = arith.constant dense<0.000000e+00> : vector<8x512xf32>
    %2 = tpu.matmul %0, %1, %cst {dimension_numbers = #tpu.dot_dimension_numbers<[1], [0], [0], [1], [0, 0, 1, 1], [], []>} : vector<8x1536xf32>, vector<1536x512xf32>, vector<8x512xf32> -> vector<8x512xf32>
    %c0_3 = arith.constant 0 : index
    %c0_4 = arith.constant 0 : index
    %3 = vector.load %arg3[%c0_3, %c0_4] : memref<1x512xf32, #tpu.memory_space<vmem>>, vector<1x512xf32>
    %4 = vector.broadcast %3 : vector<1x512xf32> to vector<8x512xf32>
    %5 = arith.addf %2, %4 : vector<8x512xf32>
    %cst_5 = arith.constant 0.000000e+00 : f32
    %6 = vector.broadcast %cst_5 : f32 to vector<8x512xf32>
    %7 = arith.maximumf %5, %6 : vector<8x512xf32>
    %c0_6 = arith.constant 0 : index
    %c0_7 = arith.constant 0 : index
    %8 = vector.load %arg4[%c0_6, %c0_7] : memref<512x256xf32, #tpu.memory_space<vmem>>, vector<512x256xf32>
    %cst_8 = arith.constant dense<0.000000e+00> : vector<8x256xf32>
    %9 = tpu.matmul %7, %8, %cst_8 {dimension_numbers = #tpu.dot_dimension_numbers<[1], [0], [0], [1], [0, 0, 1, 1], [], []>} : vector<8x512xf32>, vector<512x256xf32>, vector<8x256xf32> -> vector<8x256xf32>
    %c0_9 = arith.constant 0 : index
    %c0_10 = arith.constant 0 : index
    %10 = vector.load %arg5[%c0_9, %c0_10] : memref<1x256xf32, #tpu.memory_space<vmem>>, vector<1x256xf32>
    %11 = vector.broadcast %10 : vector<1x256xf32> to vector<8x256xf32>
    %12 = arith.addf %9, %11 : vector<8x256xf32>
    %cst_11 = arith.constant 0.000000e+00 : f32
    %13 = vector.broadcast %cst_11 : f32 to vector<8x256xf32>
    %14 = arith.maximumf %12, %13 : vector<8x256xf32>
    %c0_12 = arith.constant 0 : index
    %c0_13 = arith.constant 0 : index
    %15 = vector.load %arg6[%c0_12, %c0_13] : memref<256x64xf32, #tpu.memory_space<vmem>>, vector<256x64xf32>
    %cst_14 = arith.constant dense<0.000000e+00> : vector<8x64xf32>
    %16 = tpu.matmul %14, %15, %cst_14 {dimension_numbers = #tpu.dot_dimension_numbers<[1], [0], [0], [1], [0, 0, 1, 1], [], []>} : vector<8x256xf32>, vector<256x64xf32>, vector<8x64xf32> -> vector<8x64xf32>
    %c0_15 = arith.constant 0 : index
    %c0_16 = arith.constant 0 : index
    %17 = vector.load %arg7[%c0_15, %c0_16] : memref<1x64xf32, #tpu.memory_space<vmem>>, vector<1x64xf32>
    %18 = vector.broadcast %17 : vector<1x64xf32> to vector<8x64xf32>
    %19 = arith.addf %16, %18 : vector<8x64xf32>
    %cst_17 = arith.constant 0.000000e+00 : f32
    %20 = vector.broadcast %cst_17 : f32 to vector<8x64xf32>
    %21 = arith.maximumf %19, %20 : vector<8x64xf32>
    %c0_18 = arith.constant 0 : index
    %c0_19 = arith.constant 0 : index
    %22 = vector.load %arg8[%c0_18, %c0_19] : memref<64x1xf32, #tpu.memory_space<vmem>>, vector<64x1xf32>
    %cst_20 = arith.constant dense<0.000000e+00> : vector<8x1xf32>
    %23 = tpu.matmul %21, %22, %cst_20 {dimension_numbers = #tpu.dot_dimension_numbers<[1], [0], [0], [1], [0, 0, 1, 1], [], []>} : vector<8x64xf32>, vector<64x1xf32>, vector<8x1xf32> -> vector<8x1xf32>
    %c0_21 = arith.constant 0 : index
    %c0_22 = arith.constant 0 : index
    %24 = vector.load %arg9[%c0_21, %c0_22] : memref<1x1xf32, #tpu.memory_space<vmem>>, vector<1x1xf32>
    %25 = vector.broadcast %24 : vector<1x1xf32> to vector<8x1xf32>
    %26 = arith.addf %23, %25 : vector<8x1xf32>
    %cst_23 = arith.constant 5.000000e-01 : f32
    %27 = vector.broadcast %cst_23 : f32 to vector<8x1xf32>
    %28 = arith.mulf %27, %26 : vector<8x1xf32>
    %29 = math.tanh %28 : vector<8x1xf32>
    %cst_24 = arith.constant 5.000000e-01 : f32
    %30 = vector.broadcast %cst_24 : f32 to vector<8x1xf32>
    %31 = arith.mulf %30, %29 : vector<8x1xf32>
    %cst_25 = arith.constant 5.000000e-01 : f32
    %32 = vector.broadcast %cst_25 : f32 to vector<8x1xf32>
    %33 = arith.addf %31, %32 : vector<8x1xf32>
    %c0_26 = arith.constant 0 : index
    %c0_27 = arith.constant 0 : index
    %34 = vector.load %arg10[%c0_26, %c0_27] : memref<8x1xf32, #tpu.memory_space<vmem>>, vector<8x1xf32>
    tpu.vector_store %arg10[%c0_26, %c0_27], %33 {strides = array<i32>} : memref<8x1xf32, #tpu.memory_space<vmem>>, vector<8x1xf32>,
    return
  }
  func.func @transform_0(%arg0: i32) -> (i32, i32) {
    %c0_i32 = arith.constant 0 : i32
    %c0_i32_0 = arith.constant 0 : i32
    return %arg0, %c0_i32 : i32, i32
  }
  func.func @transform_1(%arg0: i32) -> (i32, i32) {
    %c0_i32 = arith.constant 0 : i32
    %c0_i32_0 = arith.constant 0 : i32
    %c0_i32_1 = arith.constant 0 : i32
    return %c0_i32, %c0_i32_0 : i32, i32
  }
  func.func @transform_2(%arg0: i32) -> (i32, i32) {
    %c0_i32 = arith.constant 0 : i32
    %c0_i32_0 = arith.constant 0 : i32
    %c0_i32_1 = arith.constant 0 : i32
    return %c0_i32, %c0_i32_0 : i32, i32
  }
  func.func @transform_3(%arg0: i32) -> (i32, i32) {
    %c0_i32 = arith.constant 0 : i32
    %c0_i32_0 = arith.constant 0 : i32
    %c0_i32_1 = arith.constant 0 : i32
    return %c0_i32, %c0_i32_0 : i32, i32
  }
  func.func @transform_4(%arg0: i32) -> (i32, i32) {
    %c0_i32 = arith.constant 0 : i32
    %c0_i32_0 = arith.constant 0 : i32
    %c0_i32_1 = arith.constant 0 : i32
    return %c0_i32, %c0_i32_0 : i32, i32
  }
  func.func @transform_5(%arg0: i32) -> (i32, i32) {
    %c0_i32 = arith.constant 0 : i32
    %c0_i32_0 = arith.constant 0 : i32
    %c0_i32_1 = arith.constant 0 : i32
    return %c0_i32, %c0_i32_0 : i32, i32
  }
  func.func @transform_6(%arg0: i32) -> (i32, i32) {
    %c0_i32 = arith.constant 0 : i32
    %c0_i32_0 = arith.constant 0 : i32
    %c0_i32_1 = arith.constant 0 : i32
    return %c0_i32, %c0_i32_0 : i32, i32
  }
  func.func @transform_7(%arg0: i32) -> (i32, i32) {
    %c0_i32 = arith.constant 0 : i32
    %c0_i32_0 = arith.constant 0 : i32
    %c0_i32_1 = arith.constant 0 : i32
    return %c0_i32, %c0_i32_0 : i32, i32
  }
  func.func @transform_8(%arg0: i32) -> (i32, i32) {
    %c0_i32 = arith.constant 0 : i32
    %c0_i32_0 = arith.constant 0 : i32
    %c0_i32_1 = arith.constant 0 : i32
    return %c0_i32, %c0_i32_0 : i32, i32
  }
  func.func @transform_9(%arg0: i32) -> (i32, i32) {
    %c0_i32 = arith.constant 0 : i32
    %c0_i32_0 = arith.constant 0 : i32
    return %arg0, %c0_i32 : i32, i32
  }
}

</mosaic_0001>

<llo_original>
// kernel: tpu_custom_call.1
$region0: #{tpu_custom_call.1}
  #allocation0 [shape = 'u32[]', space=smem, size = 0x4, offset = 0x4, fixed_abs, tag = 'smem constant byte address 0x4 - core index']
  #allocation1 [shape = 'u32[144,128]{1,0:T(1,128)}', space=vmem, size = 0x12000, scoped, tag = 'internal scratch']
  #allocation2 [shape = 'f32[1,1]{1,0:T(1,128)S(1)}', space=vmem, size = 0x200, scoped, tag = 'scoped memory for tpu_custom_call.1']
  %s0 = inlined_call_operand.hbm [shape: f32[8,1536], index: 0, kind: input, shape index: {}]
  %s1 = inlined_call_operand.hbm [shape: f32[1536,512], index: 1, kind: input, shape index: {}]
  %s2 = inlined_call_operand.hbm [shape: f32[1,512], index: 2, kind: input, shape index: {}]
  %s3 = inlined_call_operand.hbm [shape: f32[512,256], index: 3, kind: input, shape index: {}]
  %s4 = inlined_call_operand.hbm [shape: f32[1,256], index: 4, kind: input, shape index: {}]
  %s5 = inlined_call_operand.vmem [shape: f32[256,64], index: 5, kind: input, shape index: {}]
  %s6 = inlined_call_operand.hbm [shape: f32[1,64], index: 6, kind: input, shape index: {}]
  %s7 = inlined_call_operand.vmem [shape: f32[64,1], index: 7, kind: input, shape index: {}]
  %s8 = inlined_call_operand.<no memory space> [shape: f32[1,1], index: 8, kind: input, shape index: {}]
  %s9 = inlined_call_operand.vmem [shape: f32[8,1], index: 9, kind: output, shape index: {}]
  %s10 = sld [smem:[#allocation0]]
  $region70: #{tpu_custom_call.1} parent=0
    _
  %s12 = ssub.s32 1, %s10
  %s13 = scalar_select 0, %s12, %s10
  %v14 = vstv %s8
  %15 = vst [vmem:[#allocation2] sm:$0x1] %v14
  $region1: #{tpu_custom_call.1} parent=0
    #allocation3 [shape = 'u8[49152]{0}', space=vmem, size = 0xc000, scoped, tag = 'input window, operand 0, single buffered']
    #allocation4 [shape = 's32[1]{0}', space=sflag, size = 0x4, scoped, tag = 'scoped memory for tpu_custom_call.1']
    #allocation5 [shape = 'u8[3145728]{0}', space=vmem, size = 0x300000, scoped, tag = 'input window, operand 1, single buffered']
    #allocation6 [shape = 's32[1]{0}', space=sflag, size = 0x4, scoped, tag = 'scoped memory for tpu_custom_call.1']
    #allocation7 [shape = 'u8[2048]{0}', space=vmem, size = 0x800, scoped, tag = 'input window, operand 2, single buffered']
    #allocation8 [shape = 'u8[524288]{0}', space=vmem, size = 0x80000, scoped, tag = 'input window, operand 3, single buffered']
    #allocation9 [shape = 's32[1]{0}', space=sflag, size = 0x4, scoped, tag = 'scoped memory for tpu_custom_call.1']
    #allocation10 [shape = 'u8[1024]{0}', space=vmem, size = 0x400, scoped, tag = 'input window, operand 4, single buffered']
    #allocation11 [shape = 'u8[512]{0}', space=vmem, size = 0x400, scoped, tag = 'input window, operand 6, single buffered']
    #allocation12 [shape = 's32[1]{0}', space=sflag, size = 0x4, scoped, tag = 'scoped memory for tpu_custom_call.1']
    %16 = vsyncpa [#allocation4], 0
    %17 = vsyncpa [#allocation6], 0
    %18 = vsyncpa [#allocation9], 0
    %19 = vsyncpa [#allocation12], 0
    // Predicated region
    $region2: #{tpu_custom_call.1} parent=1 // pred_check
      _
    $region3: #{tpu_custom_call.1} parent=1 // pred_check_branch
      %21 = sbr.rel (0) target = $region5
    $region4: #{tpu_custom_call.1} parent=1 // pred_region
      %s23 = ssub.s32 1536, 1536
      %24 = vsyncadd [#allocation4], %s23
      %s26 = sshll.u32 [#allocation3], 4
      %s27 = int_to_ptr.vmem [resolvable:$true] %s26
      %29 = dma.hbm_to_vmem [thread:$0]  %s0, 1536, %s27, [#allocation4]
    $region5: #{tpu_custom_call.1} parent=1 // pred_fallthru
      _
    // Predicated region
    $region6: #{tpu_custom_call.1} parent=1 // pred_check
      _
    $region7: #{tpu_custom_call.1} parent=1 // pred_check_branch
      %31 = sbr.rel (0) target = $region9
    $region8: #{tpu_custom_call.1} parent=1 // pred_region
      %s33 = ssub.s32 98304, 98304
      %34 = vsyncadd [#allocation6], %s33
      %s35 = sshll.u32 [#allocation5], 4
      %s36 = int_to_ptr.vmem [resolvable:$true] %s35
      %41 = dma.hbm_to_vmem [thread:$0]  %s1, 98304, %s36, [#allocation6], 512, 512, 32
    $region9: #{tpu_custom_call.1} parent=1 // pred_fallthru
      _
    // Predicated region
    $region10: #{tpu_custom_call.1} parent=1 // pred_check
      _
    $region11: #{tpu_custom_call.1} parent=1 // pred_check_branch
      %43 = sbr.rel (0) target = $region13
    $region12: #{tpu_custom_call.1} parent=1 // pred_region
      %s45 = ssub.s32 64, 64
      %46 = vsyncadd [#allocation6], %s45
      %s48 = sshll.u32 [#allocation7], 4
      %s49 = int_to_ptr.vmem [resolvable:$true] %s48
      %51 = dma.hbm_to_vmem [thread:$0]  %s2, 64, %s49, [#allocation6]
    $region13: #{tpu_custom_call.1} parent=1 // pred_fallthru
      _
    // Predicated region
    $region14: #{tpu_custom_call.1} parent=1 // pred_check
      _
    $region15: #{tpu_custom_call.1} parent=1 // pred_check_branch
      %53 = sbr.rel (0) target = $region17
    $region16: #{tpu_custom_call.1} parent=1 // pred_region
      %s55 = ssub.s32 16384, 16384
      %56 = vsyncadd [#allocation9], %s55
      %s57 = sshll.u32 [#allocation8], 4
      %s58 = int_to_ptr.vmem [resolvable:$true] %s57
      %63 = dma.hbm_to_vmem [thread:$0]  %s3, 16384, %s58, [#allocation9], 256, 256, 16
    $region17: #{tpu_custom_call.1} parent=1 // pred_fallthru
      _
    // Predicated region
    $region18: #{tpu_custom_call.1} parent=1 // pred_check
      _
    $region19: #{tpu_custom_call.1} parent=1 // pred_check_branch
      %65 = sbr.rel (0) target = $region21
    $region20: #{tpu_custom_call.1} parent=1 // pred_region
      %s67 = ssub.s32 32, 32
      %68 = vsyncadd [#allocation9], %s67
      %s70 = sshll.u32 [#allocation10], 4
      %s71 = int_to_ptr.vmem [resolvable:$true] %s70
      %73 = dma.hbm_to_vmem [thread:$0]  %s4, 32, %s71, [#allocation9]
    $region21: #{tpu_custom_call.1} parent=1 // pred_fallthru
      _
    // Predicated region
    $region22: #{tpu_custom_call.1} parent=1 // pred_check
      _
    $region23: #{tpu_custom_call.1} parent=1 // pred_check_branch
      %75 = sbr.rel (0) target = $region25
    $region24: #{tpu_custom_call.1} parent=1 // pred_region
      _
    $region25: #{tpu_custom_call.1} parent=1 // pred_fallthru
      _
    // Predicated region
    $region26: #{tpu_custom_call.1} parent=1 // pred_check
      _
    $region27: #{tpu_custom_call.1} parent=1 // pred_check_branch
      %77 = sbr.rel (0) target = $region29
    $region28: #{tpu_custom_call.1} parent=1 // pred_region
      %s79 = ssub.s32 16, 16
      %80 = vsyncadd [#allocation12], %s79
      %s82 = sshll.u32 [#allocation11], 4
      %s83 = int_to_ptr.vmem [resolvable:$true] %s82
      %85 = dma.hbm_to_vmem [thread:$0]  %s6, 16, %s83, [#allocation12]
    $region29: #{tpu_custom_call.1} parent=1 // pred_fallthru
      _
    // Predicated region
    $region30: #{tpu_custom_call.1} parent=1 // pred_check
      _
    $region31: #{tpu_custom_call.1} parent=1 // pred_check_branch
      %87 = sbr.rel (0) target = $region33
    $region32: #{tpu_custom_call.1} parent=1 // pred_region
      _
    $region33: #{tpu_custom_call.1} parent=1 // pred_fallthru
      _
    // Predicated region
    $region34: #{tpu_custom_call.1} parent=1 // pred_check
      _
    $region35: #{tpu_custom_call.1} parent=1 // pred_check_branch
      %89 = sbr.rel (0) target = $region37
    $region36: #{tpu_custom_call.1} parent=1 // pred_region
      _
    $region37: #{tpu_custom_call.1} parent=1 // pred_fallthru
      _
    // Predicated region
    $region38: #{tpu_custom_call.1} parent=1 // pred_check
      _
    $region39: #{tpu_custom_call.1} parent=1 // pred_check_branch
      %91 = sbr.rel (0) target = $region41
    $region40: #{tpu_custom_call.1} parent=1 // pred_region
      %92 = dma.done [#allocation4], 1536
    $region41: #{tpu_custom_call.1} parent=1 // pred_fallthru
      _
    // Predicated region
    $region42: #{tpu_custom_call.1} parent=1 // pred_check
      _
    $region43: #{tpu_custom_call.1} parent=1 // pred_check_branch
      %94 = sbr.rel (0) target = $region45
    $region44: #{tpu_custom_call.1} parent=1 // pred_region
      %95 = dma.done [#allocation6], 98304
    $region45: #{tpu_custom_call.1} parent=1 // pred_fallthru
      _
    // Predicated region
    $region46: #{tpu_custom_call.1} parent=1 // pred_check
      _
    $region47: #{tpu_custom_call.1} parent=1 // pred_check_branch
      %97 = sbr.rel (0) target = $region49
    $region48: #{tpu_custom_call.1} parent=1 // pred_region
      %98 = dma.done [#allocation6], 64
    $region49: #{tpu_custom_call.1} parent=1 // pred_fallthru
      _
    // Predicated region
    $region50: #{tpu_custom_call.1} parent=1 // pred_check
      _
    $region51: #{tpu_custom_call.1} parent=1 // pred_check_branch
      %100 = sbr.rel (0) target = $region53
    $region52: #{tpu_custom_call.1} parent=1 // pred_region
      %101 = dma.done [#allocation9], 16384
    $region53: #{tpu_custom_call.1} parent=1 // pred_fallthru
      _
    // Predicated region
    $region54: #{tpu_custom_call.1} parent=1 // pred_check
      _
    $region55: #{tpu_custom_call.1} parent=1 // pred_check_branch
      %103 = sbr.rel (0) target = $region57
    $region56: #{tpu_custom_call.1} parent=1 // pred_region
      %104 = dma.done [#allocation9], 32
    $region57: #{tpu_custom_call.1} parent=1 // pred_fallthru
      _
    // Predicated region
    $region58: #{tpu_custom_call.1} parent=1 // pred_check
      _
    $region59: #{tpu_custom_call.1} parent=1 // pred_check_branch
      %106 = sbr.rel (0) target = $region61
    $region60: #{tpu_custom_call.1} parent=1 // pred_region
      %107 = dma.done [#allocation12], 16
    $region61: #{tpu_custom_call.1} parent=1 // pred_fallthru
      _
    %v108 = vld [vmem:[#allocation3] sm:$0xff]
    %v109 = vld [vmem:[#allocation3 + $0x8] sm:$0xff]
    %v110 = vld [vmem:[#allocation3 + $0x10] sm:$0xff]
    %v111 = vld [vmem:[#allocation3 + $0x18] sm:$0xff]
    %v112 = vld [vmem:[#allocation3 + $0x20] sm:$0xff]
    %v113 = vld [vmem:[#allocation3 + $0x28] sm:$0xff]
    %v114 = vld [vmem:[#allocation3 + $0x30] sm:$0xff]
    %v115 = vld [vmem:[#allocation3 + $0x38] sm:$0xff]
    %v116 = vld [vmem:[#allocation3 + $0x40] sm:$0xff]
    %v117 = vld [vmem:[#allocation3 + $0x48] sm:$0xff]
    %v118 = vld [vmem:[#allocation3 + $0x50] sm:$0xff]
    %v119 = vld [vmem:[#allocation3 + $0x58] sm:$0xff]
    %v120 = vld [vmem:[#allocation5] sm:$0xff]
    %v121 = vld [vmem:[#allocation5 + $0x8] sm:$0xff]
    %v122 = vld [vmem:[#allocation5 + $0x10] sm:$0xff]
    %v123 = vld [vmem:[#allocation5 + $0x18] sm:$0xff]
    %v124 = vld [vmem:[#allocation5 + $0x20] sm:$0xff]
    %v125 = vld [vmem:[#allocation5 + $0x28] sm:$0xff]
    %v126 = vld [vmem:[#allocation5 + $0x30] sm:$0xff]
    %v127 = vld [vmem:[#allocation5 + $0x38] sm:$0xff]
    %v128 = vld [vmem:[#allocation5 + $0x40] sm:$0xff]
    %v129 = vld [vmem:[#allocation5 + $0x48] sm:$0xff]
    %v130 = vld [vmem:[#allocation5 + $0x50] sm:$0xff]
    %v131 = vld [vmem:[#allocation5 + $0x58] sm:$0xff]
    %v132 = vld [vmem:[#allocation5 + $0x60] sm:$0xff]
    %v133 = vld [vmem:[#allocation5 + $0x68] sm:$0xff]
    %v134 = vld [vmem:[#allocation5 + $0x70] sm:$0xff]
    %v135 = vld [vmem:[#allocation5 + $0x78] sm:$0xff]
    %v136 = vld [vmem:[#allocation5 + $0x80] sm:$0xff]
    %v137 = vld [vmem:[#allocation5 + $0x88] sm:$0xff]
    %v138 = vld [vmem:[#allocation5 + $0x90] sm:$0xff]
    %v139 = vld [vmem:[#allocation5 + $0x98] sm:$0xff]
    %v140 = vld [vmem:[#allocation5 + $0xa0] sm:$0xff]
    %v141 = vld [vmem:[#allocation5 + $0xa8] sm:$0xff]
    %v142 = vld [vmem:[#allocation5 + $0xb0] sm:$0xff]
    %v143 = vld [vmem:[#allocation5 + $0xb8] sm:$0xff]
    %v144 = vld [vmem:[#allocation5 + $0xc0] sm:$0xff]
    %v145 = vld [vmem:[#allocation5 + $0xc8] sm:$0xff]
    %v146 = vld [vmem:[#allocation5 + $0xd0] sm:$0xff]
    %v147 = vld [vmem:[#allocation5 + $0xd8] sm:$0xff]
    %v148 = vld [vmem:[#allocation5 + $0xe0] sm:$0xff]
    %v149 = vld [vmem:[#allocation5 + $0xe8] sm:$0xff]
    %v150 = vld [vmem:[#allocation5 + $0xf0] sm:$0xff]
    %v151 = vld [vmem:[#allocation5 + $0xf8] sm:$0xff]
    %v152 = vld [vmem:[#allocation5 + $0x100] sm:$0xff]
    %v153 = vld [vmem:[#allocation5 + $0x108] sm:$0xff]
    %v154 = vld [vmem:[#allocation5 + $0x110] sm:$0xff]
    %v155 = vld [vmem:[#allocation5 + $0x118] sm:$0xff]
    %v156 = vld [vmem:[#allocation5 + $0x120] sm:$0xff]
    %v157 = vld [vmem:[#allocation5 + $0x128] sm:$0xff]
    %v158 = vld [vmem:[#allocation5 + $0x130] sm:$0xff]
    %v159 = vld [vmem:[#allocation5 + $0x138] sm:$0xff]
    %v160 = vld [vmem:[#allocation5 + $0x140] sm:$0xff]
    %v161 = vld [vmem:[#allocation5 + $0x148] sm:$0xff]
    %v162 = vld [vmem:[#allocation5 + $0x150] sm:$0xff]
    %v163 = vld [vmem:[#allocation5 + $0x158] sm:$0xff]
    %v164 = vld [vmem:[#allocation5 + $0x160] sm:$0xff]
    %v165 = vld [vmem:[#allocation5 + $0x168] sm:$0xff]
    %v166 = vld [vmem:[#allocation5 + $0x170] sm:$0xff]
    %v167 = vld [vmem:[#allocation5 + $0x178] sm:$0xff]
    %v168 = vld [vmem:[#allocation5 + $0x180] sm:$0xff]
    %v169 = vld [vmem:[#allocation5 + $0x188] sm:$0xff]
    %v170 = vld [vmem:[#allocation5 + $0x190] sm:$0xff]
    %v171 = vld [vmem:[#allocation5 + $0x198] sm:$0xff]
    %v172 = vld [vmem:[#allocation5 + $0x1a0] sm:$0xff]
    %v173 = vld [vmem:[#allocation5 + $0x1a8] sm:$0xff]
    %v174 = vld [vmem:[#allocation5 + $0x1b0] sm:$0xff]
    %v175 = vld [vmem:[#allocation5 + $0x1b8] sm:$0xff]
    %v176 = vld [vmem:[#allocation5 + $0x1c0] sm:$0xff]
    %v177 = vld [vmem:[#allocation5 + $0x1c8] sm:$0xff]
    %v178 = vld [vmem:[#allocation5 + $0x1d0] sm:$0xff]
    %v179 = vld [vmem:[#allocation5 + $0x1d8] sm:$0xff]
    %v180 = vld [vmem:[#allocation5 + $0x1e0] sm:$0xff]
    %v181 = vld [vmem:[#allocation5 + $0x1e8] sm:$0xff]
    %v182 = vld [vmem:[#allocation5 + $0x1f0] sm:$0xff]
    %v183 = vld [vmem:[#allocation5 + $0x1f8] sm:$0xff]
    %v184 = vld [vmem:[#allocation5 + $0x200] sm:$0xff]
    %v185 = vld [vmem:[#allocation5 + $0x208] sm:$0xff]
    %v186 = vld [vmem:[#allocation5 + $0x210] sm:$0xff]
    %v187 = vld [vmem:[#allocation5 + $0x218] sm:$0xff]
    %v188 = vld [vmem:[#allocation5 + $0x220] sm:$0xff]
    %v189 = vld [vmem:[#allocation5 + $0x228] sm:$0xff]
    %v190 = vld [vmem:[#allocation5 + $0x230] sm:$0xff]
    %v191 = vld [vmem:[#allocation5 + $0x238] sm:$0xff]
    %v192 = vld [vmem:[#allocation5 + $0x240] sm:$0xff]
    %v193 = vld [vmem:[#allocation5 + $0x248] sm:$0xff]
    %v194 = vld [vmem:[#allocation5 + $0x250] sm:$0xff]
    %v195 = vld [vmem:[#allocation5 + $0x258] sm:$0xff]
    %v196 = vld [vmem:[#allocation5 + $0x260] sm:$0xff]
    %v197 = vld [vmem:[#allocation5 + $0x268] sm:$0xff]
    %v198 = vld [vmem:[#allocation5 + $0x270] sm:$0xff]
    %v199 = vld [vmem:[#allocation5 + $0x278] sm:$0xff]
    %v200 = vld [vmem:[#allocation5 + $0x280] sm:$0xff]
    %v201 = vld [vmem:[#allocation5 + $0x288] sm:$0xff]
    %v202 = vld [vmem:[#allocation5 + $0x290] sm:$0xff]
    %v203 = vld [vmem:[#allocation5 + $0x298] sm:$0xff]
    %v204 = vld [vmem:[#allocation5 + $0x2a0] sm:$0xff]
    %v205 = vld [vmem:[#allocation5 + $0x2a8] sm:$0xff]
    %v206 = vld [vmem:[#allocation5 + $0x2b0] sm:$0xff]
    %v207 = vld [vmem:[#allocation5 + $0x2b8] sm:$0xff]
    %v208 = vld [vmem:[#allocation5 + $0x2c0] sm:$0xff]
    %v209 = vld [vmem:[#allocation5 + $0x2c8] sm:$0xff]
    %v210 = vld [vmem:[#allocation5 + $0x2d0] sm:$0xff]
    %v211 = vld [vmem:[#allocation5 + $0x2d8] sm:$0xff]
    %v212 = vld [vmem:[#allocation5 + $0x2e0] sm:$0xff]
    %v213 = vld [vmem:[#allocation5 + $0x2e8] sm:$0xff]
    %v214 = vld [vmem:[#allocation5 + $0x2f0] sm:$0xff]
    %v215 = vld [vmem:[#allocation5 + $0x2f8] sm:$0xff]
    %v216 = vld [vmem:[#allocation5 + $0x300] sm:$0xff]
    %v217 = vld [vmem:[#allocation5 + $0x308] sm:$0xff]
    %v218 = vld [vmem:[#allocation5 + $0x310] sm:$0xff]
    %v219 = vld [vmem:[#allocation5 + $0x318] sm:$0xff]
    %v220 = vld [vmem:[#allocation5 + $0x320] sm:$0xff]
    %v221 = vld [vmem:[#allocation5 + $0x328] sm:$0xff]
    %v222 = vld [vmem:[#allocation5 + $0x330] sm:$0xff]
    %v223 = vld [vmem:[#allocation5 + $0x338] sm:$0xff]
    %v224 = vld [vmem:[#allocation5 + $0x340] sm:$0xff]
    %v225 = vld [vmem:[#allocation5 + $0x348] sm:$0xff]
    %v226 = vld [vmem:[#allocation5 + $0x350] sm:$0xff]
    %v227 = vld [vmem:[#allocation5 + $0x358] sm:$0xff]
    %v228 = vld [vmem:[#allocation5 + $0x360] sm:$0xff]
    %v229 = vld [vmem:[#allocation5 + $0x368] sm:$0xff]
    %v230 = vld [vmem:[#allocation5 + $0x370] sm:$0xff]
    %v231 = vld [vmem:[#allocation5 + $0x378] sm:$0xff]
    %v232 = vld [vmem:[#allocation5 + $0x380] sm:$0xff]
    %v233 = vld [vmem:[#allocation5 + $0x388] sm:$0xff]
    %v234 = vld [vmem:[#allocation5 + $0x390] sm:$0xff]
    %v235 = vld [vmem:[#allocation5 + $0x398] sm:$0xff]
    %v236 = vld [vmem:[#allocation5 + $0x3a0] sm:$0xff]
    %v237 = vld [vmem:[#allocation5 + $0x3a8] sm:$0xff]
    %v238 = vld [vmem:[#allocation5 + $0x3b0] sm:$0xff]
    %v239 = vld [vmem:[#allocation5 + $0x3b8] sm:$0xff]
    %v240 = vld [vmem:[#allocation5 + $0x3c0] sm:$0xff]
    %v241 = vld [vmem:[#allocation5 + $0x3c8] sm:$0xff]
    %v242 = vld [vmem:[#allocation5 + $0x3d0] sm:$0xff]
    %v243 = vld [vmem:[#allocation5 + $0x3d8] sm:$0xff]
    %v244 = vld [vmem:[#allocation5 + $0x3e0] sm:$0xff]
    %v245 = vld [vmem:[#allocation5 + $0x3e8] sm:$0xff]
    %v246 = vld [vmem:[#allocation5 + $0x3f0] sm:$0xff]
    %v247 = vld [vmem:[#allocation5 + $0x3f8] sm:$0xff]
    %v248 = vld [vmem:[#allocation5 + $0x400] sm:$0xff]
    %v249 = vld [vmem:[#allocation5 + $0x408] sm:$0xff]
    %v250 = vld [vmem:[#allocation5 + $0x410] sm:$0xff]
    %v251 = vld [vmem:[#allocation5 + $0x418] sm:$0xff]
    %v252 = vld [vmem:[#allocation5 + $0x420] sm:$0xff]
    %v253 = vld [vmem:[#allocation5 + $0x428] sm:$0xff]
    %v254 = vld [vmem:[#allocation5 + $0x430] sm:$0xff]
    %v255 = vld [vmem:[#allocation5 + $0x438] sm:$0xff]
    %v256 = vld [vmem:[#allocation5 + $0x440] sm:$0xff]
    %v257 = vld [vmem:[#allocation5 + $0x448] sm:$0xff]
    %v258 = vld [vmem:[#allocation5 + $0x450] sm:$0xff]
    %v259 = vld [vmem:[#allocation5 + $0x458] sm:$0xff]
    %v260 = vld [vmem:[#allocation5 + $0x460] sm:$0xff]
    %v261 = vld [vmem:[#allocation5 + $0x468] sm:$0xff]
    %v262 = vld [vmem:[#allocation5 + $0x470] sm:$0xff]
    %v263 = vld [vmem:[#allocation5 + $0x478] sm:$0xff]
    %v264 = vld [vmem:[#allocation5 + $0x480] sm:$0xff]
    %v265 = vld [vmem:[#allocation5 + $0x488] sm:$0xff]
    %v266 = vld [vmem:[#allocation5 + $0x490] sm:$0xff]
    %v267 = vld [vmem:[#allocation5 + $0x498] sm:$0xff]
    %v268 = vld [vmem:[#allocation5 + $0x4a0] sm:$0xff]
    %v269 = vld [vmem:[#allocation5 + $0x4a8] sm:$0xff]
    %v270 = vld [vmem:[#allocation5 + $0x4b0] sm:$0xff]
    %v271 = vld [vmem:[#allocation5 + $0x4b8] sm:$0xff]
    %v272 = vld [vmem:[#allocation5 + $0x4c0] sm:$0xff]
    %v273 = vld [vmem:[#allocation5 + $0x4c8] sm:$0xff]
    %v274 = vld [vmem:[#allocation5 + $0x4d0] sm:$0xff]
    %v275 = vld [vmem:[#allocation5 + $0x4d8] sm:$0xff]
    %v276 = vld [vmem:[#allocation5 + $0x4e0] sm:$0xff]
    %v277 = vld [vmem:[#allocation5 + $0x4e8] sm:$0xff]
    %v278 = vld [vmem:[#allocation5 + $0x4f0] sm:$0xff]
    %v279 = vld [vmem:[#allocation5 + $0x4f8] sm:$0xff]
    %v280 = vld [vmem:[#allocation5 + $0x500] sm:$0xff]
    %v281 = vld [vmem:[#allocation5 + $0x508] sm:$0xff]
    %v282 = vld [vmem:[#allocation5 + $0x510] sm:$0xff]
    %v283 = vld [vmem:[#allocation5 + $0x518] sm:$0xff]
    %v284 = vld [vmem:[#allocation5 + $0x520] sm:$0xff]
    %v285 = vld [vmem:[#allocation5 + $0x528] sm:$0xff]
    %v286 = vld [vmem:[#allocation5 + $0x530] sm:$0xff]
    %v287 = vld [vmem:[#allocation5 + $0x538] sm:$0xff]
    %v288 = vld [vmem:[#allocation5 + $0x540] sm:$0xff]
    %v289 = vld [vmem:[#allocation5 + $0x548] sm:$0xff]
    %v290 = vld [vmem:[#allocation5 + $0x550] sm:$0xff]
    %v291 = vld [vmem:[#allocation5 + $0x558] sm:$0xff]
    %v292 = vld [vmem:[#allocation5 + $0x560] sm:$0xff]
    %v293 = vld [vmem:[#allocation5 + $0x568] sm:$0xff]
    %v294 = vld [vmem:[#allocation5 + $0x570] sm:$0xff]
    %v295 = vld [vmem:[#allocation5 + $0x578] sm:$0xff]
    %v296 = vld [vmem:[#allocation5 + $0x580] sm:$0xff]
    %v297 = vld [vmem:[#allocation5 + $0x588] sm:$0xff]
    %v298 = vld [vmem:[#allocation5 + $0x590] sm:$0xff]
    %v299 = vld [vmem:[#allocation5 + $0x598] sm:$0xff]
    %v300 = vld [vmem:[#allocation5 + $0x5a0] sm:$0xff]
    %v301 = vld [vmem:[#allocation5 + $0x5a8] sm:$0xff]
    %v302 = vld [vmem:[#allocation5 + $0x5b0] sm:$0xff]
    %v303 = vld [vmem:[#allocation5 + $0x5b8] sm:$0xff]
    %v304 = vld [vmem:[#allocation5 + $0x5c0] sm:$0xff]
    %v305 = vld [vmem:[#allocation5 + $0x5c8] sm:$0xff]
    %v306 = vld [vmem:[#allocation5 + $0x5d0] sm:$0xff]
    %v307 = vld [vmem:[#allocation5 + $0x5d8] sm:$0xff]
    %v308 = vld [vmem:[#allocation5 + $0x5e0] sm:$0xff]
    %v309 = vld [vmem:[#allocation5 + $0x5e8] sm:$0xff]
    %v310 = vld [vmem:[#allocation5 + $0x5f0] sm:$0xff]
    %v311 = vld [vmem:[#allocation5 + $0x5f8] sm:$0xff]
    %v312 = vld [vmem:[#allocation5 + $0x600] sm:$0xff]
    %v313 = vld [vmem:[#allocation5 + $0x608] sm:$0xff]
    %v314 = vld [vmem:[#allocation5 + $0x610] sm:$0xff]
    %v315 = vld [vmem:[#allocation5 + $0x618] sm:$0xff]
    %v316 = vld [vmem:[#allocation5 + $0x620] sm:$0xff]
    %v317 = vld [vmem:[#allocation5 + $0x628] sm:$0xff]
    %v318 = vld [vmem:[#allocation5 + $0x630] sm:$0xff]
    %v319 = vld [vmem:[#allocation5 + $0x638] sm:$0xff]
    %v320 = vld [vmem:[#allocation5 + $0x640] sm:$0xff]
    %v321 = vld [vmem:[#allocation5 + $0x648] sm:$0xff]
    %v322 = vld [vmem:[#allocation5 + $0x650] sm:$0xff]
    %v323 = vld [vmem:[#allocation5 + $0x658] sm:$0xff]
    %v324 = vld [vmem:[#allocation5 + $0x660] sm:$0xff]
    %v325 = vld [vmem:[#allocation5 + $0x668] sm:$0xff]
    %v326 = vld [vmem:[#allocation5 + $0x670] sm:$0xff]
    %v327 = vld [vmem:[#allocation5 + $0x678] sm:$0xff]
    %v328 = vld [vmem:[#allocation5 + $0x680] sm:$0xff]
    %v329 = vld [vmem:[#allocation5 + $0x688] sm:$0xff]
    %v330 = vld [vmem:[#allocation5 + $0x690] sm:$0xff]
    %v331 = vld [vmem:[#allocation5 + $0x698] sm:$0xff]
    %v332 = vld [vmem:[#allocation5 + $0x6a0] sm:$0xff]
    %v333 = vld [vmem:[#allocation5 + $0x6a8] sm:$0xff]
    %v334 = vld [vmem:[#allocation5 + $0x6b0] sm:$0xff]
    %v335 = vld [vmem:[#allocation5 + $0x6b8] sm:$0xff]
    %v336 = vld [vmem:[#allocation5 + $0x6c0] sm:$0xff]
    %v337 = vld [vmem:[#allocation5 + $0x6c8] sm:$0xff]
    %v338 = vld [vmem:[#allocation5 + $0x6d0] sm:$0xff]
    %v339 = vld [vmem:[#allocation5 + $0x6d8] sm:$0xff]
    %v340 = vld [vmem:[#allocation5 + $0x6e0] sm:$0xff]
    %v341 = vld [vmem:[#allocation5 + $0x6e8] sm:$0xff]
    %v342 = vld [vmem:[#allocation5 + $0x6f0] sm:$0xff]
    %v343 = vld [vmem:[#allocation5 + $0x6f8] sm:$0xff]
    %v344 = vld [vmem:[#allocation5 + $0x700] sm:$0xff]
    %v345 = vld [vmem:[#allocation5 + $0x708] sm:$0xff]
    %v346 = vld [vmem:[#allocation5 + $0x710] sm:$0xff]
    %v347 = vld [vmem:[#allocation5 + $0x718] sm:$0xff]
    %v348 = vld [vmem:[#allocation5 + $0x720] sm:$0xff]
    %v349 = vld [vmem:[#allocation5 + $0x728] sm:$0xff]
    %v350 = vld [vmem:[#allocation5 + $0x730] sm:$0xff]
    %v351 = vld [vmem:[#allocation5 + $0x738] sm:$0xff]
    %v352 = vld [vmem:[#allocation5 + $0x740] sm:$0xff]
    %v353 = vld [vmem:[#allocation5 + $0x748] sm:$0xff]
    %v354 = vld [vmem:[#allocation5 + $0x750] sm:$0xff]
    %v355 = vld [vmem:[#allocation5 + $0x758] sm:$0xff]
    %v356 = vld [vmem:[#allocation5 + $0x760] sm:$0xff]
    %v357 = vld [vmem:[#allocation5 + $0x768] sm:$0xff]
    %v358 = vld [vmem:[#allocation5 + $0x770] sm:$0xff]
    %v359 = vld [vmem:[#allocation5 + $0x778] sm:$0xff]
    %v360 = vld [vmem:[#allocation5 + $0x780] sm:$0xff]
    %v361 = vld [vmem:[#allocation5 + $0x788] sm:$0xff]
    %v362 = vld [vmem:[#allocation5 + $0x790] sm:$0xff]
    %v363 = vld [vmem:[#allocation5 + $0x798] sm:$0xff]
    %v364 = vld [vmem:[#allocation5 + $0x7a0] sm:$0xff]
    %v365 = vld [vmem:[#allocation5 + $0x7a8] sm:$0xff]
    %v366 = vld [vmem:[#allocation5 + $0x7b0] sm:$0xff]
    %v367 = vld [vmem:[#allocation5 + $0x7b8] sm:$0xff]
    %v368 = vld [vmem:[#allocation5 + $0x7c0] sm:$0xff]
    %v369 = vld [vmem:[#allocation5 + $0x7c8] sm:$0xff]
    %v370 = vld [vmem:[#allocation5 + $0x7d0] sm:$0xff]
    %v371 = vld [vmem:[#allocation5 + $0x7d8] sm:$0xff]
    %v372 = vld [vmem:[#allocation5 + $0x7e0] sm:$0xff]
    %v373 = vld [vmem:[#allocation5 + $0x7e8] sm:$0xff]
    %v374 = vld [vmem:[#allocation5 + $0x7f0] sm:$0xff]
    %v375 = vld [vmem:[#allocation5 + $0x7f8] sm:$0xff]
    %v376 = vld [vmem:[#allocation5 + $0x800] sm:$0xff]
    %v377 = vld [vmem:[#allocation5 + $0x808] sm:$0xff]
    %v378 = vld [vmem:[#allocation5 + $0x810] sm:$0xff]
    %v379 = vld [vmem:[#allocation5 + $0x818] sm:$0xff]
    %v380 = vld [vmem:[#allocation5 + $0x820] sm:$0xff]
    %v381 = vld [vmem:[#allocation5 + $0x828] sm:$0xff]
    %v382 = vld [vmem:[#allocation5 + $0x830] sm:$0xff]
    %v383 = vld [vmem:[#allocation5 + $0x838] sm:$0xff]
    %v384 = vld [vmem:[#allocation5 + $0x840] sm:$0xff]
    %v385 = vld [vmem:[#allocation5 + $0x848] sm:$0xff]
    %v386 = vld [vmem:[#allocation5 + $0x850] sm:$0xff]
    %v387 = vld [vmem:[#allocation5 + $0x858] sm:$0xff]
    %v388 = vld [vmem:[#allocation5 + $0x860] sm:$0xff]
    %v389 = vld [vmem:[#allocation5 + $0x868] sm:$0xff]
    %v390 = vld [vmem:[#allocation5 + $0x870] sm:$0xff]
    %v391 = vld [vmem:[#allocation5 + $0x878] sm:$0xff]
    %v392 = vld [vmem:[#allocation5 + $0x880] sm:$0xff]
    %v393 = vld [vmem:[#allocation5 + $0x888] sm:$0xff]
    %v394 = vld [vmem:[#allocation5 + $0x890] sm:$0xff]
    %v395 = vld [vmem:[#allocation5 + $0x898] sm:$0xff]
    %v396 = vld [vmem:[#allocation5 + $0x8a0] sm:$0xff]
    %v397 = vld [vmem:[#allocation5 + $0x8a8] sm:$0xff]
    %v398 = vld [vmem:[#allocation5 + $0x8b0] sm:$0xff]
    %v399 = vld [vmem:[#allocation5 + $0x8b8] sm:$0xff]
    %v400 = vld [vmem:[#allocation5 + $0x8c0] sm:$0xff]
    %v401 = vld [vmem:[#allocation5 + $0x8c8] sm:$0xff]
    %v402 = vld [vmem:[#allocation5 + $0x8d0] sm:$0xff]
    %v403 = vld [vmem:[#allocation5 + $0x8d8] sm:$0xff]
    %v404 = vld [vmem:[#allocation5 + $0x8e0] sm:$0xff]
    %v405 = vld [vmem:[#allocation5 + $0x8e8] sm:$0xff]
    %v406 = vld [vmem:[#allocation5 + $0x8f0] sm:$0xff]
    %v407 = vld [vmem:[#allocation5 + $0x8f8] sm:$0xff]
    %v408 = vld [vmem:[#allocation5 + $0x900] sm:$0xff]
    %v409 = vld [vmem:[#allocation5 + $0x908] sm:$0xff]
    %v410 = vld [vmem:[#allocation5 + $0x910] sm:$0xff]
    %v411 = vld [vmem:[#allocation5 + $0x918] sm:$0xff]
    %v412 = vld [vmem:[#allocation5 + $0x920] sm:$0xff]
    %v413 = vld [vmem:[#allocation5 + $0x928] sm:$0xff]
    %v414 = vld [vmem:[#allocation5 + $0x930] sm:$0xff]
    %v415 = vld [vmem:[#allocation5 + $0x938] sm:$0xff]
    %v416 = vld [vmem:[#allocation5 + $0x940] sm:$0xff]
    %v417 = vld [vmem:[#allocation5 + $0x948] sm:$0xff]
    %v418 = vld [vmem:[#allocation5 + $0x950] sm:$0xff]
    %v419 = vld [vmem:[#allocation5 + $0x958] sm:$0xff]
    %v420 = vld [vmem:[#allocation5 + $0x960] sm:$0xff]
    %v421 = vld [vmem:[#allocation5 + $0x968] sm:$0xff]
    %v422 = vld [vmem:[#allocation5 + $0x970] sm:$0xff]
    %v423 = vld [vmem:[#allocation5 + $0x978] sm:$0xff]
    %v424 = vld [vmem:[#allocation5 + $0x980] sm:$0xff]
    %v425 = vld [vmem:[#allocation5 + $0x988] sm:$0xff]
    %v426 = vld [vmem:[#allocation5 + $0x990] sm:$0xff]
    %v427 = vld [vmem:[#allocation5 + $0x998] sm:$0xff]
    %v428 = vld [vmem:[#allocation5 + $0x9a0] sm:$0xff]
    %v429 = vld [vmem:[#allocation5 + $0x9a8] sm:$0xff]
    %v430 = vld [vmem:[#allocation5 + $0x9b0] sm:$0xff]
    %v431 = vld [vmem:[#allocation5 + $0x9b8] sm:$0xff]
    %v432 = vld [vmem:[#allocation5 + $0x9c0] sm:$0xff]
    %v433 = vld [vmem:[#allocation5 + $0x9c8] sm:$0xff]
    %v434 = vld [vmem:[#allocation5 + $0x9d0] sm:$0xff]
    %v435 = vld [vmem:[#allocation5 + $0x9d8] sm:$0xff]
    %v436 = vld [vmem:[#allocation5 + $0x9e0] sm:$0xff]
    %v437 = vld [vmem:[#allocation5 + $0x9e8] sm:$0xff]
    %v438 = vld [vmem:[#allocation5 + $0x9f0] sm:$0xff]
    %v439 = vld [vmem:[#allocation5 + $0x9f8] sm:$0xff]
    %v440 = vld [vmem:[#allocation5 + $0xa00] sm:$0xff]
    %v441 = vld [vmem:[#allocation5 + $0xa08] sm:$0xff]
    %v442 = vld [vmem:[#allocation5 + $0xa10] sm:$0xff]
    %v443 = vld [vmem:[#allocation5 + $0xa18] sm:$0xff]
    %v444 = vld [vmem:[#allocation5 + $0xa20] sm:$0xff]
    %v445 = vld [vmem:[#allocation5 + $0xa28] sm:$0xff]
    %v446 = vld [vmem:[#allocation5 + $0xa30] sm:$0xff]
    %v447 = vld [vmem:[#allocation5 + $0xa38] sm:$0xff]
    %v448 = vld [vmem:[#allocation5 + $0xa40] sm:$0xff]
    %v449 = vld [vmem:[#allocation5 + $0xa48] sm:$0xff]
    %v450 = vld [vmem:[#allocation5 + $0xa50] sm:$0xff]
    %v451 = vld [vmem:[#allocation5 + $0xa58] sm:$0xff]
    %v452 = vld [vmem:[#allocation5 + $0xa60] sm:$0xff]
    %v453 = vld [vmem:[#allocation5 + $0xa68] sm:$0xff]
    %v454 = vld [vmem:[#allocation5 + $0xa70] sm:$0xff]
    %v455 = vld [vmem:[#allocation5 + $0xa78] sm:$0xff]
    %v456 = vld [vmem:[#allocation5 + $0xa80] sm:$0xff]
    %v457 = vld [vmem:[#allocation5 + $0xa88] sm:$0xff]
    %v458 = vld [vmem:[#allocation5 + $0xa90] sm:$0xff]
    %v459 = vld [vmem:[#allocation5 + $0xa98] sm:$0xff]
    %v460 = vld [vmem:[#allocation5 + $0xaa0] sm:$0xff]
    %v461 = vld [vmem:[#allocation5 + $0xaa8] sm:$0xff]
    %v462 = vld [vmem:[#allocation5 + $0xab0] sm:$0xff]
    %v463 = vld [vmem:[#allocation5 + $0xab8] sm:$0xff]
    %v464 = vld [vmem:[#allocation5 + $0xac0] sm:$0xff]
    %v465 = vld [vmem:[#allocation5 + $0xac8] sm:$0xff]
    %v466 = vld [vmem:[#allocation5 + $0xad0] sm:$0xff]
    %v467 = vld [vmem:[#allocation5 + $0xad8] sm:$0xff]
    %v468 = vld [vmem:[#allocation5 + $0xae0] sm:$0xff]
    %v469 = vld [vmem:[#allocation5 + $0xae8] sm:$0xff]
    %v470 = vld [vmem:[#allocation5 + $0xaf0] sm:$0xff]
    %v471 = vld [vmem:[#allocation5 + $0xaf8] sm:$0xff]
    %v472 = vld [vmem:[#allocation5 + $0xb00] sm:$0xff]
    %v473 = vld [vmem:[#allocation5 + $0xb08] sm:$0xff]
    %v474 = vld [vmem:[#allocation5 + $0xb10] sm:$0xff]
    %v475 = vld [vmem:[#allocation5 + $0xb18] sm:$0xff]
    %v476 = vld [vmem:[#allocation5 + $0xb20] sm:$0xff]
    %v477 = vld [vmem:[#allocation5 + $0xb28] sm:$0xff]
    %v478 = vld [vmem:[#allocation5 + $0xb30] sm:$0xff]
    %v479 = vld [vmem:[#allocation5 + $0xb38] sm:$0xff]
    %v480 = vld [vmem:[#allocation5 + $0xb40] sm:$0xff]
    %v481 = vld [vmem:[#allocation5 + $0xb48] sm:$0xff]
    %v482 = vld [vmem:[#allocation5 + $0xb50] sm:$0xff]
    %v483 = vld [vmem:[#allocation5 + $0xb58] sm:$0xff]
    %v484 = vld [vmem:[#allocation5 + $0xb60] sm:$0xff]
    %v485 = vld [vmem:[#allocation5 + $0xb68] sm:$0xff]
    %v486 = vld [vmem:[#allocation5 + $0xb70] sm:$0xff]
    %v487 = vld [vmem:[#allocation5 + $0xb78] sm:$0xff]
    %v488 = vld [vmem:[#allocation5 + $0xb80] sm:$0xff]
    %v489 = vld [vmem:[#allocation5 + $0xb88] sm:$0xff]
    %v490 = vld [vmem:[#allocation5 + $0xb90] sm:$0xff]
    %v491 = vld [vmem:[#allocation5 + $0xb98] sm:$0xff]
    %v492 = vld [vmem:[#allocation5 + $0xba0] sm:$0xff]
    %v493 = vld [vmem:[#allocation5 + $0xba8] sm:$0xff]
    %v494 = vld [vmem:[#allocation5 + $0xbb0] sm:$0xff]
    %v495 = vld [vmem:[#allocation5 + $0xbb8] sm:$0xff]
    %v496 = vld [vmem:[#allocation5 + $0xbc0] sm:$0xff]
    %v497 = vld [vmem:[#allocation5 + $0xbc8] sm:$0xff]
    %v498 = vld [vmem:[#allocation5 + $0xbd0] sm:$0xff]
    %v499 = vld [vmem:[#allocation5 + $0xbd8] sm:$0xff]
    %v500 = vld [vmem:[#allocation5 + $0xbe0] sm:$0xff]
    %v501 = vld [vmem:[#allocation5 + $0xbe8] sm:$0xff]
    %v502 = vld [vmem:[#allocation5 + $0xbf0] sm:$0xff]
    %v503 = vld [vmem:[#allocation5 + $0xbf8] sm:$0xff]
    %v504 = vld [vmem:[#allocation5 + $0xc00] sm:$0xff]
    %v505 = vld [vmem:[#allocation5 + $0xc08] sm:$0xff]
    %v506 = vld [vmem:[#allocation5 + $0xc10] sm:$0xff]
    %v507 = vld [vmem:[#allocation5 + $0xc18] sm:$0xff]
    %v508 = vld [vmem:[#allocation5 + $0xc20] sm:$0xff]
    %v509 = vld [vmem:[#allocation5 + $0xc28] sm:$0xff]
    %v510 = vld [vmem:[#allocation5 + $0xc30] sm:$0xff]
    %v511 = vld [vmem:[#allocation5 + $0xc38] sm:$0xff]
    %v512 = vld [vmem:[#allocation5 + $0xc40] sm:$0xff]
    %v513 = vld [vmem:[#allocation5 + $0xc48] sm:$0xff]
    %v514 = vld [vmem:[#allocation5 + $0xc50] sm:$0xff]
    %v515 = vld [vmem:[#allocation5 + $0xc58] sm:$0xff]
    %v516 = vld [vmem:[#allocation5 + $0xc60] sm:$0xff]
    %v517 = vld [vmem:[#allocation5 + $0xc68] sm:$0xff]
    %v518 = vld [vmem:[#allocation5 + $0xc70] sm:$0xff]
    %v519 = vld [vmem:[#allocation5 + $0xc78] sm:$0xff]
    %v520 = vld [vmem:[#allocation5 + $0xc80] sm:$0xff]
    %v521 = vld [vmem:[#allocation5 + $0xc88] sm:$0xff]
    %v522 = vld [vmem:[#allocation5 + $0xc90] sm:$0xff]
    %v523 = vld [vmem:[#allocation5 + $0xc98] sm:$0xff]
    %v524 = vld [vmem:[#allocation5 + $0xca0] sm:$0xff]
    %v525 = vld [vmem:[#allocation5 + $0xca8] sm:$0xff]
    %v526 = vld [vmem:[#allocation5 + $0xcb0] sm:$0xff]
    %v527 = vld [vmem:[#allocation5 + $0xcb8] sm:$0xff]
    %v528 = vld [vmem:[#allocation5 + $0xcc0] sm:$0xff]
    %v529 = vld [vmem:[#allocation5 + $0xcc8] sm:$0xff]
    %v530 = vld [vmem:[#allocation5 + $0xcd0] sm:$0xff]
    %v531 = vld [vmem:[#allocation5 + $0xcd8] sm:$0xff]
    %v532 = vld [vmem:[#allocation5 + $0xce0] sm:$0xff]
    %v533 = vld [vmem:[#allocation5 + $0xce8] sm:$0xff]
    %v534 = vld [vmem:[#allocation5 + $0xcf0] sm:$0xff]
    %v535 = vld [vmem:[#allocation5 + $0xcf8] sm:$0xff]
    %v536 = vld [vmem:[#allocation5 + $0xd00] sm:$0xff]
    %v537 = vld [vmem:[#allocation5 + $0xd08] sm:$0xff]
    %v538 = vld [vmem:[#allocation5 + $0xd10] sm:$0xff]
    %v539 = vld [vmem:[#allocation5 + $0xd18] sm:$0xff]
    %v540 = vld [vmem:[#allocation5 + $0xd20] sm:$0xff]
    %v541 = vld [vmem:[#allocation5 + $0xd28] sm:$0xff]
    %v542 = vld [vmem:[#allocation5 + $0xd30] sm:$0xff]
    %v543 = vld [vmem:[#allocation5 + $0xd38] sm:$0xff]
    %v544 = vld [vmem:[#allocation5 + $0xd40] sm:$0xff]
    %v545 = vld [vmem:[#allocation5 + $0xd48] sm:$0xff]
    %v546 = vld [vmem:[#allocation5 + $0xd50] sm:$0xff]
    %v547 = vld [vmem:[#allocation5 + $0xd58] sm:$0xff]
    %v548 = vld [vmem:[#allocation5 + $0xd60] sm:$0xff]
    %v549 = vld [vmem:[#allocation5 + $0xd68] sm:$0xff]
    %v550 = vld [vmem:[#allocation5 + $0xd70] sm:$0xff]
    %v551 = vld [vmem:[#allocation5 + $0xd78] sm:$0xff]
    %v552 = vld [vmem:[#allocation5 + $0xd80] sm:$0xff]
    %v553 = vld [vmem:[#allocation5 + $0xd88] sm:$0xff]
    %v554 = vld [vmem:[#allocation5 + $0xd90] sm:$0xff]
    %v555 = vld [vmem:[#allocation5 + $0xd98] sm:$0xff]
    %v556 = vld [vmem:[#allocation5 + $0xda0] sm:$0xff]
    %v557 = vld [vmem:[#allocation5 + $0xda8] sm:$0xff]
    %v558 = vld [vmem:[#allocation5 + $0xdb0] sm:$0xff]
    %v559 = vld [vmem:[#allocation5 + $0xdb8] sm:$0xff]
    %v560 = vld [vmem:[#allocation5 + $0xdc0] sm:$0xff]
    %v561 = vld [vmem:[#allocation5 + $0xdc8] sm:$0xff]
    %v562 = vld [vmem:[#allocation5 + $0xdd0] sm:$0xff]
    %v563 = vld [vmem:[#allocation5 + $0xdd8] sm:$0xff]
    %v564 = vld [vmem:[#allocation5 + $0xde0] sm:$0xff]
    %v565 = vld [vmem:[#allocation5 + $0xde8] sm:$0xff]
    %v566 = vld [vmem:[#allocation5 + $0xdf0] sm:$0xff]
    %v567 = vld [vmem:[#allocation5 + $0xdf8] sm:$0xff]
    %v568 = vld [vmem:[#allocation5 + $0xe00] sm:$0xff]
    %v569 = vld [vmem:[#allocation5 + $0xe08] sm:$0xff]
    %v570 = vld [vmem:[#allocation5 + $0xe10] sm:$0xff]
    %v571 = vld [vmem:[#allocation5 + $0xe18] sm:$0xff]
    %v572 = vld [vmem:[#allocation5 + $0xe20] sm:$0xff]
    %v573 = vld [vmem:[#allocation5 + $0xe28] sm:$0xff]
    %v574 = vld [vmem:[#allocation5 + $0xe30] sm:$0xff]
    %v575 = vld [vmem:[#allocation5 + $0xe38] sm:$0xff]
    %v576 = vld [vmem:[#allocation5 + $0xe40] sm:$0xff]
    %v577 = vld [vmem:[#allocation5 + $0xe48] sm:$0xff]
    %v578 = vld [vmem:[#allocation5 + $0xe50] sm:$0xff]
    %v579 = vld [vmem:[#allocation5 + $0xe58] sm:$0xff]
    %v580 = vld [vmem:[#allocation5 + $0xe60] sm:$0xff]
    %v581 = vld [vmem:[#allocation5 + $0xe68] sm:$0xff]
    %v582 = vld [vmem:[#allocation5 + $0xe70] sm:$0xff]
    %v583 = vld [vmem:[#allocation5 + $0xe78] sm:$0xff]
    %v584 = vld [vmem:[#allocation5 + $0xe80] sm:$0xff]
    %v585 = vld [vmem:[#allocation5 + $0xe88] sm:$0xff]
    %v586 = vld [vmem:[#allocation5 + $0xe90] sm:$0xff]
    %v587 = vld [vmem:[#allocation5 + $0xe98] sm:$0xff]
    %v588 = vld [vmem:[#allocation5 + $0xea0] sm:$0xff]
    %v589 = vld [vmem:[#allocation5 + $0xea8] sm:$0xff]
    %v590 = vld [vmem:[#allocation5 + $0xeb0] sm:$0xff]
    %v591 = vld [vmem:[#allocation5 + $0xeb8] sm:$0xff]
    %v592 = vld [vmem:[#allocation5 + $0xec0] sm:$0xff]
    %v593 = vld [vmem:[#allocation5 + $0xec8] sm:$0xff]
    %v594 = vld [vmem:[#allocation5 + $0xed0] sm:$0xff]
    %v595 = vld [vmem:[#allocation5 + $0xed8] sm:$0xff]
    %v596 = vld [vmem:[#allocation5 + $0xee0] sm:$0xff]
    %v597 = vld [vmem:[#allocation5 + $0xee8] sm:$0xff]
    %v598 = vld [vmem:[#allocation5 + $0xef0] sm:$0xff]
    %v599 = vld [vmem:[#allocation5 + $0xef8] sm:$0xff]
    %v600 = vld [vmem:[#allocation5 + $0xf00] sm:$0xff]
    %v601 = vld [vmem:[#allocation5 + $0xf08] sm:$0xff]
    %v602 = vld [vmem:[#allocation5 + $0xf10] sm:$0xff]
    %v603 = vld [vmem:[#allocation5 + $0xf18] sm:$0xff]
    %v604 = vld [vmem:[#allocation5 + $0xf20] sm:$0xff]
    %v605 = vld [vmem:[#allocation5 + $0xf28] sm:$0xff]
    %v606 = vld [vmem:[#allocation5 + $0xf30] sm:$0xff]
    %v607 = vld [vmem:[#allocation5 + $0xf38] sm:$0xff]
    %v608 = vld [vmem:[#allocation5 + $0xf40] sm:$0xff]
    %v609 = vld [vmem:[#allocation5 + $0xf48] sm:$0xff]
    %v610 = vld [vmem:[#allocation5 + $0xf50] sm:$0xff]
    %v611 = vld [vmem:[#allocation5 + $0xf58] sm:$0xff]
    %v612 = vld [vmem:[#allocation5 + $0xf60] sm:$0xff]
    %v613 = vld [vmem:[#allocation5 + $0xf68] sm:$0xff]
    %v614 = vld [vmem:[#allocation5 + $0xf70] sm:$0xff]
    %v615 = vld [vmem:[#allocation5 + $0xf78] sm:$0xff]
    %v616 = vld [vmem:[#allocation5 + $0xf80] sm:$0xff]
    %v617 = vld [vmem:[#allocation5 + $0xf88] sm:$0xff]
    %v618 = vld [vmem:[#allocation5 + $0xf90] sm:$0xff]
    %v619 = vld [vmem:[#allocation5 + $0xf98] sm:$0xff]
    %v620 = vld [vmem:[#allocation5 + $0xfa0] sm:$0xff]
    %v621 = vld [vmem:[#allocation5 + $0xfa8] sm:$0xff]
    %v622 = vld [vmem:[#allocation5 + $0xfb0] sm:$0xff]
    %v623 = vld [vmem:[#allocation5 + $0xfb8] sm:$0xff]
    %v624 = vld [vmem:[#allocation5 + $0xfc0] sm:$0xff]
    %v625 = vld [vmem:[#allocation5 + $0xfc8] sm:$0xff]
    %v626 = vld [vmem:[#allocation5 + $0xfd0] sm:$0xff]
    %v627 = vld [vmem:[#allocation5 + $0xfd8] sm:$0xff]
    %v628 = vld [vmem:[#allocation5 + $0xfe0] sm:$0xff]
    %v629 = vld [vmem:[#allocation5 + $0xfe8] sm:$0xff]
    %v630 = vld [vmem:[#allocation5 + $0xff0] sm:$0xff]
    %v631 = vld [vmem:[#allocation5 + $0xff8] sm:$0xff]
    %v632 = vld [vmem:[#allocation5 + $0x1000] sm:$0xff]
    %v633 = vld [vmem:[#allocation5 + $0x1008] sm:$0xff]
    %v634 = vld [vmem:[#allocation5 + $0x1010] sm:$0xff]
    %v635 = vld [vmem:[#allocation5 + $0x1018] sm:$0xff]
    %v636 = vld [vmem:[#allocation5 + $0x1020] sm:$0xff]
    %v637 = vld [vmem:[#allocation5 + $0x1028] sm:$0xff]
    %v638 = vld [vmem:[#allocation5 + $0x1030] sm:$0xff]
    %v639 = vld [vmem:[#allocation5 + $0x1038] sm:$0xff]
    %v640 = vld [vmem:[#allocation5 + $0x1040] sm:$0xff]
    %v641 = vld [vmem:[#allocation5 + $0x1048] sm:$0xff]
    %v642 = vld [vmem:[#allocation5 + $0x1050] sm:$0xff]
    %v643 = vld [vmem:[#allocation5 + $0x1058] sm:$0xff]
    %v644 = vld [vmem:[#allocation5 + $0x1060] sm:$0xff]
    %v645 = vld [vmem:[#allocation5 + $0x1068] sm:$0xff]
    %v646 = vld [vmem:[#allocation5 + $0x1070] sm:$0xff]
    %v647 = vld [vmem:[#allocation5 + $0x1078] sm:$0xff]
    %v648 = vld [vmem:[#allocation5 + $0x1080] sm:$0xff]
    %v649 = vld [vmem:[#allocation5 + $0x1088] sm:$0xff]
    %v650 = vld [vmem:[#allocation5 + $0x1090] sm:$0xff]
    %v651 = vld [vmem:[#allocation5 + $0x1098] sm:$0xff]
    %v652 = vld [vmem:[#allocation5 + $0x10a0] sm:$0xff]
    %v653 = vld [vmem:[#allocation5 + $0x10a8] sm:$0xff]
    %v654 = vld [vmem:[#allocation5 + $0x10b0] sm:$0xff]
    %v655 = vld [vmem:[#allocation5 + $0x10b8] sm:$0xff]
    %v656 = vld [vmem:[#allocation5 + $0x10c0] sm:$0xff]
    %v657 = vld [vmem:[#allocation5 + $0x10c8] sm:$0xff]
    %v658 = vld [vmem:[#allocation5 + $0x10d0] sm:$0xff]
    %v659 = vld [vmem:[#allocation5 + $0x10d8] sm:$0xff]
    %v660 = vld [vmem:[#allocation5 + $0x10e0] sm:$0xff]
    %v661 = vld [vmem:[#allocation5 + $0x10e8] sm:$0xff]
    %v662 = vld [vmem:[#allocation5 + $0x10f0] sm:$0xff]
    %v663 = vld [vmem:[#allocation5 + $0x10f8] sm:$0xff]
    %v664 = vld [vmem:[#allocation5 + $0x1100] sm:$0xff]
    %v665 = vld [vmem:[#allocation5 + $0x1108] sm:$0xff]
    %v666 = vld [vmem:[#allocation5 + $0x1110] sm:$0xff]
    %v667 = vld [vmem:[#allocation5 + $0x1118] sm:$0xff]
    %v668 = vld [vmem:[#allocation5 + $0x1120] sm:$0xff]
    %v669 = vld [vmem:[#allocation5 + $0x1128] sm:$0xff]
    %v670 = vld [vmem:[#allocation5 + $0x1130] sm:$0xff]
    %v671 = vld [vmem:[#allocation5 + $0x1138] sm:$0xff]
    %v672 = vld [vmem:[#allocation5 + $0x1140] sm:$0xff]
    %v673 = vld [vmem:[#allocation5 + $0x1148] sm:$0xff]
    %v674 = vld [vmem:[#allocation5 + $0x1150] sm:$0xff]
    %v675 = vld [vmem:[#allocation5 + $0x1158] sm:$0xff]
    %v676 = vld [vmem:[#allocation5 + $0x1160] sm:$0xff]
    %v677 = vld [vmem:[#allocation5 + $0x1168] sm:$0xff]
    %v678 = vld [vmem:[#allocation5 + $0x1170] sm:$0xff]
    %v679 = vld [vmem:[#allocation5 + $0x1178] sm:$0xff]
    %v680 = vld [vmem:[#allocation5 + $0x1180] sm:$0xff]
    %v681 = vld [vmem:[#allocation5 + $0x1188] sm:$0xff]
    %v682 = vld [vmem:[#allocation5 + $0x1190] sm:$0xff]
    %v683 = vld [vmem:[#allocation5 + $0x1198] sm:$0xff]
    %v684 = vld [vmem:[#allocation5 + $0x11a0] sm:$0xff]
    %v685 = vld [vmem:[#allocation5 + $0x11a8] sm:$0xff]
    %v686 = vld [vmem:[#allocation5 + $0x11b0] sm:$0xff]
    %v687 = vld [vmem:[#allocation5 + $0x11b8] sm:$0xff]
    %v688 = vld [vmem:[#allocation5 + $0x11c0] sm:$0xff]
    %v689 = vld [vmem:[#allocation5 + $0x11c8] sm:$0xff]
    %v690 = vld [vmem:[#allocation5 + $0x11d0] sm:$0xff]
    %v691 = vld [vmem:[#allocation5 + $0x11d8] sm:$0xff]
    %v692 = vld [vmem:[#allocation5 + $0x11e0] sm:$0xff]
    %v693 = vld [vmem:[#allocation5 + $0x11e8] sm:$0xff]
    %v694 = vld [vmem:[#allocation5 + $0x11f0] sm:$0xff]
    %v695 = vld [vmem:[#allocation5 + $0x11f8] sm:$0xff]
    %v696 = vld [vmem:[#allocation5 + $0x1200] sm:$0xff]
    %v697 = vld [vmem:[#allocation5 + $0x1208] sm:$0xff]
    %v698 = vld [vmem:[#allocation5 + $0x1210] sm:$0xff]
    %v699 = vld [vmem:[#allocation5 + $0x1218] sm:$0xff]
    %v700 = vld [vmem:[#allocation5 + $0x1220] sm:$0xff]
    %v701 = vld [vmem:[#allocation5 + $0x1228] sm:$0xff]
    %v702 = vld [vmem:[#allocation5 + $0x1230] sm:$0xff]
    %v703 = vld [vmem:[#allocation5 + $0x1238] sm:$0xff]
    %v704 = vld [vmem:[#allocation5 + $0x1240] sm:$0xff]
    %v705 = vld [vmem:[#allocation5 + $0x1248] sm:$0xff]
    %v706 = vld [vmem:[#allocation5 + $0x1250] sm:$0xff]
    %v707 = vld [vmem:[#allocation5 + $0x1258] sm:$0xff]
    %v708 = vld [vmem:[#allocation5 + $0x1260] sm:$0xff]
    %v709 = vld [vmem:[#allocation5 + $0x1268] sm:$0xff]
    %v710 = vld [vmem:[#allocation5 + $0x1270] sm:$0xff]
    %v711 = vld [vmem:[#allocation5 + $0x1278] sm:$0xff]
    %v712 = vld [vmem:[#allocation5 + $0x1280] sm:$0xff]
    %v713 = vld [vmem:[#allocation5 + $0x1288] sm:$0xff]
    %v714 = vld [vmem:[#allocation5 + $0x1290] sm:$0xff]
    %v715 = vld [vmem:[#allocation5 + $0x1298] sm:$0xff]
    %v716 = vld [vmem:[#allocation5 + $0x12a0] sm:$0xff]
    %v717 = vld [vmem:[#allocation5 + $0x12a8] sm:$0xff]
    %v718 = vld [vmem:[#allocation5 + $0x12b0] sm:$0xff]
    %v719 = vld [vmem:[#allocation5 + $0x12b8] sm:$0xff]
    %v720 = vld [vmem:[#allocation5 + $0x12c0] sm:$0xff]
    %v721 = vld [vmem:[#allocation5 + $0x12c8] sm:$0xff]
    %v722 = vld [vmem:[#allocation5 + $0x12d0] sm:$0xff]
    %v723 = vld [vmem:[#allocation5 + $0x12d8] sm:$0xff]
    %v724 = vld [vmem:[#allocation5 + $0x12e0] sm:$0xff]
    %v725 = vld [vmem:[#allocation5 + $0x12e8] sm:$0xff]
    %v726 = vld [vmem:[#allocation5 + $0x12f0] sm:$0xff]
    %v727 = vld [vmem:[#allocation5 + $0x12f8] sm:$0xff]
    %v728 = vld [vmem:[#allocation5 + $0x1300] sm:$0xff]
    %v729 = vld [vmem:[#allocation5 + $0x1308] sm:$0xff]
    %v730 = vld [vmem:[#allocation5 + $0x1310] sm:$0xff]
    %v731 = vld [vmem:[#allocation5 + $0x1318] sm:$0xff]
    %v732 = vld [vmem:[#allocation5 + $0x1320] sm:$0xff]
    %v733 = vld [vmem:[#allocation5 + $0x1328] sm:$0xff]
    %v734 = vld [vmem:[#allocation5 + $0x1330] sm:$0xff]
    %v735 = vld [vmem:[#allocation5 + $0x1338] sm:$0xff]
    %v736 = vld [vmem:[#allocation5 + $0x1340] sm:$0xff]
    %v737 = vld [vmem:[#allocation5 + $0x1348] sm:$0xff]
    %v738 = vld [vmem:[#allocation5 + $0x1350] sm:$0xff]
    %v739 = vld [vmem:[#allocation5 + $0x1358] sm:$0xff]
    %v740 = vld [vmem:[#allocation5 + $0x1360] sm:$0xff]
    %v741 = vld [vmem:[#allocation5 + $0x1368] sm:$0xff]
    %v742 = vld [vmem:[#allocation5 + $0x1370] sm:$0xff]
    %v743 = vld [vmem:[#allocation5 + $0x1378] sm:$0xff]
    %v744 = vld [vmem:[#allocation5 + $0x1380] sm:$0xff]
    %v745 = vld [vmem:[#allocation5 + $0x1388] sm:$0xff]
    %v746 = vld [vmem:[#allocation5 + $0x1390] sm:$0xff]
    %v747 = vld [vmem:[#allocation5 + $0x1398] sm:$0xff]
    %v748 = vld [vmem:[#allocation5 + $0x13a0] sm:$0xff]
    %v749 = vld [vmem:[#allocation5 + $0x13a8] sm:$0xff]
    %v750 = vld [vmem:[#allocation5 + $0x13b0] sm:$0xff]
    %v751 = vld [vmem:[#allocation5 + $0x13b8] sm:$0xff]
    %v752 = vld [vmem:[#allocation5 + $0x13c0] sm:$0xff]
    %v753 = vld [vmem:[#allocation5 + $0x13c8] sm:$0xff]
    %v754 = vld [vmem:[#allocation5 + $0x13d0] sm:$0xff]
    %v755 = vld [vmem:[#allocation5 + $0x13d8] sm:$0xff]
    %v756 = vld [vmem:[#allocation5 + $0x13e0] sm:$0xff]
    %v757 = vld [vmem:[#allocation5 + $0x13e8] sm:$0xff]
    %v758 = vld [vmem:[#allocation5 + $0x13f0] sm:$0xff]
    %v759 = vld [vmem:[#allocation5 + $0x13f8] sm:$0xff]
    %v760 = vld [vmem:[#allocation5 + $0x1400] sm:$0xff]
    %v761 = vld [vmem:[#allocation5 + $0x1408] sm:$0xff]
    %v762 = vld [vmem:[#allocation5 + $0x1410] sm:$0xff]
    %v763 = vld [vmem:[#allocation5 + $0x1418] sm:$0xff]
    %v764 = vld [vmem:[#allocation5 + $0x1420] sm:$0xff]
    %v765 = vld [vmem:[#allocation5 + $0x1428] sm:$0xff]
    %v766 = vld [vmem:[#allocation5 + $0x1430] sm:$0xff]
    %v767 = vld [vmem:[#allocation5 + $0x1438] sm:$0xff]
    %v768 = vld [vmem:[#allocation5 + $0x1440] sm:$0xff]
    %v769 = vld [vmem:[#allocation5 + $0x1448] sm:$0xff]
    %v770 = vld [vmem:[#allocation5 + $0x1450] sm:$0xff]
    %v771 = vld [vmem:[#allocation5 + $0x1458] sm:$0xff]
    %v772 = vld [vmem:[#allocation5 + $0x1460] sm:$0xff]
    %v773 = vld [vmem:[#allocation5 + $0x1468] sm:$0xff]
    %v774 = vld [vmem:[#allocation5 + $0x1470] sm:$0xff]
    %v775 = vld [vmem:[#allocation5 + $0x1478] sm:$0xff]
    %v776 = vld [vmem:[#allocation5 + $0x1480] sm:$0xff]
    %v777 = vld [vmem:[#allocation5 + $0x1488] sm:$0xff]
    %v778 = vld [vmem:[#allocation5 + $0x1490] sm:$0xff]
    %v779 = vld [vmem:[#allocation5 + $0x1498] sm:$0xff]
    %v780 = vld [vmem:[#allocation5 + $0x14a0] sm:$0xff]
    %v781 = vld [vmem:[#allocation5 + $0x14a8] sm:$0xff]
    %v782 = vld [vmem:[#allocation5 + $0x14b0] sm:$0xff]
    %v783 = vld [vmem:[#allocation5 + $0x14b8] sm:$0xff]
    %v784 = vld [vmem:[#allocation5 + $0x14c0] sm:$0xff]
    %v785 = vld [vmem:[#allocation5 + $0x14c8] sm:$0xff]
    %v786 = vld [vmem:[#allocation5 + $0x14d0] sm:$0xff]
    %v787 = vld [vmem:[#allocation5 + $0x14d8] sm:$0xff]
    %v788 = vld [vmem:[#allocation5 + $0x14e0] sm:$0xff]
    %v789 = vld [vmem:[#allocation5 + $0x14e8] sm:$0xff]
    %v790 = vld [vmem:[#allocation5 + $0x14f0] sm:$0xff]
    %v791 = vld [vmem:[#allocation5 + $0x14f8] sm:$0xff]
    %v792 = vld [vmem:[#allocation5 + $0x1500] sm:$0xff]
    %v793 = vld [vmem:[#allocation5 + $0x1508] sm:$0xff]
    %v794 = vld [vmem:[#allocation5 + $0x1510] sm:$0xff]
    %v795 = vld [vmem:[#allocation5 + $0x1518] sm:$0xff]
    %v796 = vld [vmem:[#allocation5 + $0x1520] sm:$0xff]
    %v797 = vld [vmem:[#allocation5 + $0x1528] sm:$0xff]
    %v798 = vld [vmem:[#allocation5 + $0x1530] sm:$0xff]
    %v799 = vld [vmem:[#allocation5 + $0x1538] sm:$0xff]
    %v800 = vld [vmem:[#allocation5 + $0x1540] sm:$0xff]
    %v801 = vld [vmem:[#allocation5 + $0x1548] sm:$0xff]
    %v802 = vld [vmem:[#allocation5 + $0x1550] sm:$0xff]
    %v803 = vld [vmem:[#allocation5 + $0x1558] sm:$0xff]
    %v804 = vld [vmem:[#allocation5 + $0x1560] sm:$0xff]
    %v805 = vld [vmem:[#allocation5 + $0x1568] sm:$0xff]
    %v806 = vld [vmem:[#allocation5 + $0x1570] sm:$0xff]
    %v807 = vld [vmem:[#allocation5 + $0x1578] sm:$0xff]
    %v808 = vld [vmem:[#allocation5 + $0x1580] sm:$0xff]
    %v809 = vld [vmem:[#allocation5 + $0x1588] sm:$0xff]
    %v810 = vld [vmem:[#allocation5 + $0x1590] sm:$0xff]
    %v811 = vld [vmem:[#allocation5 + $0x1598] sm:$0xff]
    %v812 = vld [vmem:[#allocation5 + $0x15a0] sm:$0xff]
    %v813 = vld [vmem:[#allocation5 + $0x15a8] sm:$0xff]
    %v814 = vld [vmem:[#allocation5 + $0x15b0] sm:$0xff]
    %v815 = vld [vmem:[#allocation5 + $0x15b8] sm:$0xff]
    %v816 = vld [vmem:[#allocation5 + $0x15c0] sm:$0xff]
    %v817 = vld [vmem:[#allocation5 + $0x15c8] sm:$0xff]
    %v818 = vld [vmem:[#allocation5 + $0x15d0] sm:$0xff]
    %v819 = vld [vmem:[#allocation5 + $0x15d8] sm:$0xff]
    %v820 = vld [vmem:[#allocation5 + $0x15e0] sm:$0xff]
    %v821 = vld [vmem:[#allocation5 + $0x15e8] sm:$0xff]
    %v822 = vld [vmem:[#allocation5 + $0x15f0] sm:$0xff]
    %v823 = vld [vmem:[#allocation5 + $0x15f8] sm:$0xff]
    %v824 = vld [vmem:[#allocation5 + $0x1600] sm:$0xff]
    %v825 = vld [vmem:[#allocation5 + $0x1608] sm:$0xff]
    %v826 = vld [vmem:[#allocation5 + $0x1610] sm:$0xff]
    %v827 = vld [vmem:[#allocation5 + $0x1618] sm:$0xff]
    %v828 = vld [vmem:[#allocation5 + $0x1620] sm:$0xff]
    %v829 = vld [vmem:[#allocation5 + $0x1628] sm:$0xff]
    %v830 = vld [vmem:[#allocation5 + $0x1630] sm:$0xff]
    %v831 = vld [vmem:[#allocation5 + $0x1638] sm:$0xff]
    %v832 = vld [vmem:[#allocation5 + $0x1640] sm:$0xff]
    %v833 = vld [vmem:[#allocation5 + $0x1648] sm:$0xff]
    %v834 = vld [vmem:[#allocation5 + $0x1650] sm:$0xff]
    %v835 = vld [vmem:[#allocation5 + $0x1658] sm:$0xff]
    %v836 = vld [vmem:[#allocation5 + $0x1660] sm:$0xff]
    %v837 = vld [vmem:[#allocation5 + $0x1668] sm:$0xff]
    %v838 = vld [vmem:[#allocation5 + $0x1670] sm:$0xff]
    %v839 = vld [vmem:[#allocation5 + $0x1678] sm:$0xff]
    %v840 = vld [vmem:[#allocation5 + $0x1680] sm:$0xff]
    %v841 = vld [vmem:[#allocation5 + $0x1688] sm:$0xff]
    %v842 = vld [vmem:[#allocation5 + $0x1690] sm:$0xff]
    %v843 = vld [vmem:[#allocation5 + $0x1698] sm:$0xff]
    %v844 = vld [vmem:[#allocation5 + $0x16a0] sm:$0xff]
    %v845 = vld [vmem:[#allocation5 + $0x16a8] sm:$0xff]
    %v846 = vld [vmem:[#allocation5 + $0x16b0] sm:$0xff]
    %v847 = vld [vmem:[#allocation5 + $0x16b8] sm:$0xff]
    %v848 = vld [vmem:[#allocation5 + $0x16c0] sm:$0xff]
    %v849 = vld [vmem:[#allocation5 + $0x16c8] sm:$0xff]
    %v850 = vld [vmem:[#allocation5 + $0x16d0] sm:$0xff]
    %v851 = vld [vmem:[#allocation5 + $0x16d8] sm:$0xff]
    %v852 = vld [vmem:[#allocation5 + $0x16e0] sm:$0xff]
    %v853 = vld [vmem:[#allocation5 + $0x16e8] sm:$0xff]
    %v854 = vld [vmem:[#allocation5 + $0x16f0] sm:$0xff]
    %v855 = vld [vmem:[#allocation5 + $0x16f8] sm:$0xff]
    %v856 = vld [vmem:[#allocation5 + $0x1700] sm:$0xff]
    %v857 = vld [vmem:[#allocation5 + $0x1708] sm:$0xff]
    %v858 = vld [vmem:[#allocation5 + $0x1710] sm:$0xff]
    %v859 = vld [vmem:[#allocation5 + $0x1718] sm:$0xff]
    %v860 = vld [vmem:[#allocation5 + $0x1720] sm:$0xff]
    %v861 = vld [vmem:[#allocation5 + $0x1728] sm:$0xff]
    %v862 = vld [vmem:[#allocation5 + $0x1730] sm:$0xff]
    %v863 = vld [vmem:[#allocation5 + $0x1738] sm:$0xff]
    %v864 = vld [vmem:[#allocation5 + $0x1740] sm:$0xff]
    %v865 = vld [vmem:[#allocation5 + $0x1748] sm:$0xff]
    %v866 = vld [vmem:[#allocation5 + $0x1750] sm:$0xff]
    %v867 = vld [vmem:[#allocation5 + $0x1758] sm:$0xff]
    %v868 = vld [vmem:[#allocation5 + $0x1760] sm:$0xff]
    %v869 = vld [vmem:[#allocation5 + $0x1768] sm:$0xff]
    %v870 = vld [vmem:[#allocation5 + $0x1770] sm:$0xff]
    %v871 = vld [vmem:[#allocation5 + $0x1778] sm:$0xff]
    %v872 = vld [vmem:[#allocation5 + $0x1780] sm:$0xff]
    %v873 = vld [vmem:[#allocation5 + $0x1788] sm:$0xff]
    %v874 = vld [vmem:[#allocation5 + $0x1790] sm:$0xff]
    %v875 = vld [vmem:[#allocation5 + $0x1798] sm:$0xff]
    %v876 = vld [vmem:[#allocation5 + $0x17a0] sm:$0xff]
    %v877 = vld [vmem:[#allocation5 + $0x17a8] sm:$0xff]
    %v878 = vld [vmem:[#allocation5 + $0x17b0] sm:$0xff]
    %v879 = vld [vmem:[#allocation5 + $0x17b8] sm:$0xff]
    %v880 = vld [vmem:[#allocation5 + $0x17c0] sm:$0xff]
    %v881 = vld [vmem:[#allocation5 + $0x17c8] sm:$0xff]
    %v882 = vld [vmem:[#allocation5 + $0x17d0] sm:$0xff]
    %v883 = vld [vmem:[#allocation5 + $0x17d8] sm:$0xff]
    %v884 = vld [vmem:[#allocation5 + $0x17e0] sm:$0xff]
    %v885 = vld [vmem:[#allocation5 + $0x17e8] sm:$0xff]
    %v886 = vld [vmem:[#allocation5 + $0x17f0] sm:$0xff]
    %v887 = vld [vmem:[#allocation5 + $0x17f8] sm:$0xff]
    %v888 = vld [vmem:[#allocation7] sm:$0xf]
    %v890 = vlaneseq
    %v891 = vshrl.u32 %v890, 7
    %v892 = vsub.s32 0, %v891
    %v893 = vrot.slane %v888, %v892
    %v894 = vlaneseq
    %v895 = vshrl.u32 %v894, 7
    %v896 = vsub.s32 1, %v895
    %v897 = vrot.slane %v888, %v896
    %v898 = vlaneseq
    %v899 = vshrl.u32 %v898, 7
    %v900 = vsub.s32 2, %v899
    %v901 = vrot.slane %v888, %v900
    %v902 = vlaneseq
    %v903 = vshrl.u32 %v902, 7
    %v904 = vsub.s32 3, %v903
    %v905 = vrot.slane %v888, %v904
    %910 = vmatprep.subr.mxu0 %v181
    %911 = vmatpush1.msra.mxu0 %v180
    %912 = vmatprep.subr.mxu0 %v177
    %913 = vmatpush1.msra.mxu0 %v176
    %914 = vmatprep.subr.mxu0 %v173
    %915 = vmatpush1.msra.mxu0 %v172
    %916 = vmatprep.subr.mxu0 %v169
    %917 = vmatpush1.msra.mxu0 %v168
    %918 = vmatprep.subr.mxu0 %v165
    %919 = vmatpush1.msra.mxu0 %v164
    %920 = vmatprep.subr.mxu0 %v161
    %921 = vmatpush1.msra.mxu0 %v160
    %922 = vmatprep.subr.mxu0 %v157
    %923 = vmatpush1.msra.mxu0 %v156
    %924 = vmatprep.subr.mxu0 %v153
    %925 = vmatpush1.msra.mxu0 %v152
    %926 = vmatprep.subr.mxu0 %v149
    %927 = vmatpush1.msra.mxu0 %v148
    %928 = vmatprep.subr.mxu0 %v145
    %929 = vmatpush1.msra.mxu0 %v144
    %930 = vmatprep.subr.mxu0 %v141
    %931 = vmatpush1.msra.mxu0 %v140
    %932 = vmatprep.subr.mxu0 %v137
    %933 = vmatpush1.msra.mxu0 %v136
    %934 = vmatprep.subr.mxu0 %v133
    %935 = vmatpush1.msra.mxu0 %v132
    %936 = vmatprep.subr.mxu0 %v129
    %937 = vmatpush1.msra.mxu0 %v128
    %938 = vmatprep.subr.mxu0 %v125
    %939 = vmatpush1.msra.mxu0 %v124
    %940 = vmatprep.subr.mxu0 %v121
    %941 = vmatpush1.msra.mxu0 %v120
    %942 = vmatprep.subr.mxu0 %v245
    %943 = vmatpush2.msra.mxu0 %v244
    %944 = vmatprep.subr.mxu0 %v241
    %945 = vmatpush2.msra.mxu0 %v240
    %946 = vmatprep.subr.mxu0 %v237
    %947 = vmatpush2.msra.mxu0 %v236
    %948 = vmatprep.subr.mxu0 %v233
    %949 = vmatpush2.msra.mxu0 %v232
    %950 = vmatprep.subr.mxu0 %v229
    %951 = vmatpush2.msra.mxu0 %v228
    %952 = vmatprep.subr.mxu0 %v225
    %953 = vmatpush2.msra.mxu0 %v224
    %954 = vmatprep.subr.mxu0 %v221
    %955 = vmatpush2.msra.mxu0 %v220
    %956 = vmatprep.subr.mxu0 %v217
    %957 = vmatpush2.msra.mxu0 %v216
    %958 = vmatprep.subr.mxu0 %v213
    %959 = vmatpush2.msra.mxu0 %v212
    %960 = vmatprep.subr.mxu0 %v209
    %961 = vmatpush2.msra.mxu0 %v208
    %962 = vmatprep.subr.mxu0 %v205
    %963 = vmatpush2.msra.mxu0 %v204
    %964 = vmatprep.subr.mxu0 %v201
    %965 = vmatpush2.msra.mxu0 %v200
    %966 = vmatprep.subr.mxu0 %v197
    %967 = vmatpush2.msra.mxu0 %v196
    %968 = vmatprep.subr.mxu0 %v193
    %969 = vmatpush2.msra.mxu0 %v192
    %970 = vmatprep.subr.mxu0 %v189
    %971 = vmatpush2.msra.mxu0 %v188
    %972 = vmatprep.subr.mxu0 %v185
    %973 = vmatpush2.msra.mxu0 %v184
    %974 = vmatprep.mubr.f32.mxu0 %v109
    %975 = vmatmul.mubr.f32.gmra.mxu0 %v108
    %v976 = vpop.f32.mrf.mxu0
    %v977 = vadd.f32 %v893, %v976
    %v978 = vpop.f32.mrf.mxu0
    %v979 = vadd.f32 %v897, %v978
    %980 = vdwg.mxu0
    %981 = vmatprep.subr.mxu0 %v309
    %982 = vmatpush1.msra.mxu0 %v308
    %983 = vmatprep.subr.mxu0 %v305
    %984 = vmatpush1.msra.mxu0 %v304
    %985 = vmatprep.subr.mxu0 %v301
    %986 = vmatpush1.msra.mxu0 %v300
    %987 = vmatprep.subr.mxu0 %v297
    %988 = vmatpush1.msra.mxu0 %v296
    %989 = vmatprep.subr.mxu0 %v293
    %990 = vmatpush1.msra.mxu0 %v292
    %991 = vmatprep.subr.mxu0 %v289
    %992 = vmatpush1.msra.mxu0 %v288
    %993 = vmatprep.subr.mxu0 %v285
    %994 = vmatpush1.msra.mxu0 %v284
    %995 = vmatprep.subr.mxu0 %v281
    %996 = vmatpush1.msra.mxu0 %v280
    %997 = vmatprep.subr.mxu0 %v277
    %998 = vmatpush1.msra.mxu0 %v276
    %999 = vmatprep.subr.mxu0 %v273
    %1000 = vmatpush1.msra.mxu0 %v272
    %1001 = vmatprep.subr.mxu0 %v269
    %1002 = vmatpush1.msra.mxu0 %v268
    %1003 = vmatprep.subr.mxu0 %v265
    %1004 = vmatpush1.msra.mxu0 %v264
    %1005 = vmatprep.subr.mxu0 %v261
    %1006 = vmatpush1.msra.mxu0 %v260
    %1007 = vmatprep.subr.mxu0 %v257
    %1008 = vmatpush1.msra.mxu0 %v256
    %1009 = vmatprep.subr.mxu0 %v253
    %1010 = vmatpush1.msra.mxu0 %v252
    %1011 = vmatprep.subr.mxu0 %v249
    %1012 = vmatpush1.msra.mxu0 %v248
    %1013 = vmatprep.subr.mxu0 %v373
    %1014 = vmatpush2.msra.mxu0 %v372
    %1015 = vmatprep.subr.mxu0 %v369
    %1016 = vmatpush2.msra.mxu0 %v368
    %1017 = vmatprep.subr.mxu0 %v365
    %1018 = vmatpush2.msra.mxu0 %v364
    %1019 = vmatprep.subr.mxu0 %v361
    %1020 = vmatpush2.msra.mxu0 %v360
    %1021 = vmatprep.subr.mxu0 %v357
    %1022 = vmatpush2.msra.mxu0 %v356
    %1023 = vmatprep.subr.mxu0 %v353
    %1024 = vmatpush2.msra.mxu0 %v352
    %1025 = vmatprep.subr.mxu0 %v349
    %1026 = vmatpush2.msra.mxu0 %v348
    %1027 = vmatprep.subr.mxu0 %v345
    %1028 = vmatpush2.msra.mxu0 %v344
    %1029 = vmatprep.subr.mxu0 %v341
    %1030 = vmatpush2.msra.mxu0 %v340
    %1031 = vmatprep.subr.mxu0 %v337
    %1032 = vmatpush2.msra.mxu0 %v336
    %1033 = vmatprep.subr.mxu0 %v333
    %1034 = vmatpush2.msra.mxu0 %v332
    %1035 = vmatprep.subr.mxu0 %v329
    %1036 = vmatpush2.msra.mxu0 %v328
    %1037 = vmatprep.subr.mxu0 %v325
    %1038 = vmatpush2.msra.mxu0 %v324
    %1039 = vmatprep.subr.mxu0 %v321
    %1040 = vmatpush2.msra.mxu0 %v320
    %1041 = vmatprep.subr.mxu0 %v317
    %1042 = vmatpush2.msra.mxu0 %v316
    %1043 = vmatprep.subr.mxu0 %v313
    %1044 = vmatpush2.msra.mxu0 %v312
    %1045 = vmatprep.mubr.f32.mxu0 %v111
    %1046 = vmatmul.mubr.f32.gmra.mxu0 %v110
    %v1047 = vpop.f32.mrf.mxu0
    %v1048 = vadd.f32 %v977, %v1047
    %v1049 = vpop.f32.mrf.mxu0
    %v1050 = vadd.f32 %v979, %v1049
    %1051 = vdwg.mxu0
    %1052 = vmatprep.subr.mxu0 %v437
    %1053 = vmatpush1.msra.mxu0 %v436
    %1054 = vmatprep.subr.mxu0 %v433
    %1055 = vmatpush1.msra.mxu0 %v432
    %1056 = vmatprep.subr.mxu0 %v429
    %1057 = vmatpush1.msra.mxu0 %v428
    %1058 = vmatprep.subr.mxu0 %v425
    %1059 = vmatpush1.msra.mxu0 %v424
    %1060 = vmatprep.subr.mxu0 %v421
    %1061 = vmatpush1.msra.mxu0 %v420
    %1062 = vmatprep.subr.mxu0 %v417
    %1063 = vmatpush1.msra.mxu0 %v416
    %1064 = vmatprep.subr.mxu0 %v413
    %1065 = vmatpush1.msra.mxu0 %v412
    %1066 = vmatprep.subr.mxu0 %v409
    %1067 = vmatpush1.msra.mxu0 %v408
    %1068 = vmatprep.subr.mxu0 %v405
    %1069 = vmatpush1.msra.mxu0 %v404
    %1070 = vmatprep.subr.mxu0 %v401
    %1071 = vmatpush1.msra.mxu0 %v400
    %1072 = vmatprep.subr.mxu0 %v397
    %1073 = vmatpush1.msra.mxu0 %v396
    %1074 = vmatprep.subr.mxu0 %v393
    %1075 = vmatpush1.msra.mxu0 %v392
    %1076 = vmatprep.subr.mxu0 %v389
    %1077 = vmatpush1.msra.mxu0 %v388
    %1078 = vmatprep.subr.mxu0 %v385
    %1079 = vmatpush1.msra.mxu0 %v384
    %1080 = vmatprep.subr.mxu0 %v381
    %1081 = vmatpush1.msra.mxu0 %v380
    %1082 = vmatprep.subr.mxu0 %v377
    %1083 = vmatpush1.msra.mxu0 %v376
    %1084 = vmatprep.subr.mxu0 %v501
    %1085 = vmatpush2.msra.mxu0 %v500
    %1086 = vmatprep.subr.mxu0 %v497
    %1087 = vmatpush2.msra.mxu0 %v496
    %1088 = vmatprep.subr.mxu0 %v493
    %1089 = vmatpush2.msra.mxu0 %v492
    %1090 = vmatprep.subr.mxu0 %v489
    %1091 = vmatpush2.msra.mxu0 %v488
    %1092 = vmatprep.subr.mxu0 %v485
    %1093 = vmatpush2.msra.mxu0 %v484
    %1094 = vmatprep.subr.mxu0 %v481
    %1095 = vmatpush2.msra.mxu0 %v480
    %1096 = vmatprep.subr.mxu0 %v477
    %1097 = vmatpush2.msra.mxu0 %v476
    %1098 = vmatprep.subr.mxu0 %v473
    %1099 = vmatpush2.msra.mxu0 %v472
    %1100 = vmatprep.subr.mxu0 %v469
    %1101 = vmatpush2.msra.mxu0 %v468
    %1102 = vmatprep.subr.mxu0 %v465
    %1103 = vmatpush2.msra.mxu0 %v464
    %1104 = vmatprep.subr.mxu0 %v461
    %1105 = vmatpush2.msra.mxu0 %v460
    %1106 = vmatprep.subr.mxu0 %v457
    %1107 = vmatpush2.msra.mxu0 %v456
    %1108 = vmatprep.subr.mxu0 %v453
    %1109 = vmatpush2.msra.mxu0 %v452
    %1110 = vmatprep.subr.mxu0 %v449
    %1111 = vmatpush2.msra.mxu0 %v448
    %1112 = vmatprep.subr.mxu0 %v445
    %1113 = vmatpush2.msra.mxu0 %v444
    %1114 = vmatprep.subr.mxu0 %v441
    %1115 = vmatpush2.msra.mxu0 %v440
    %1116 = vmatprep.mubr.f32.mxu0 %v113
    %1117 = vmatmul.mubr.f32.gmra.mxu0 %v112
    %v1118 = vpop.f32.mrf.mxu0
    %v1119 = vadd.f32 %v1048, %v1118
    %v1120 = vpop.f32.mrf.mxu0
    %v1121 = vadd.f32 %v1050, %v1120
    %1122 = vdwg.mxu0
    %1123 = vmatprep.subr.mxu0 %v565
    %1124 = vmatpush1.msra.mxu0 %v564
    %1125 = vmatprep.subr.mxu0 %v561
    %1126 = vmatpush1.msra.mxu0 %v560
    %1127 = vmatprep.subr.mxu0 %v557
    %1128 = vmatpush1.msra.mxu0 %v556
    %1129 = vmatprep.subr.mxu0 %v553
    %1130 = vmatpush1.msra.mxu0 %v552
    %1131 = vmatprep.subr.mxu0 %v549
    %1132 = vmatpush1.msra.mxu0 %v548
    %1133 = vmatprep.subr.mxu0 %v545
    %1134 = vmatpush1.msra.mxu0 %v544
    %1135 = vmatprep.subr.mxu0 %v541
    %1136 = vmatpush1.msra.mxu0 %v540
    %1137 = vmatprep.subr.mxu0 %v537
    %1138 = vmatpush1.msra.mxu0 %v536
    %1139 = vmatprep.subr.mxu0 %v533
    %1140 = vmatpush1.msra.mxu0 %v532
    %1141 = vmatprep.subr.mxu0 %v529
    %1142 = vmatpush1.msra.mxu0 %v528
    %1143 = vmatprep.subr.mxu0 %v525
    %1144 = vmatpush1.msra.mxu0 %v524
    %1145 = vmatprep.subr.mxu0 %v521
    %1146 = vmatpush1.msra.mxu0 %v520
    %1147 = vmatprep.subr.mxu0 %v517
    %1148 = vmatpush1.msra.mxu0 %v516
    %1149 = vmatprep.subr.mxu0 %v513
    %1150 = vmatpush1.msra.mxu0 %v512
    %1151 = vmatprep.subr.mxu0 %v509
    %1152 = vmatpush1.msra.mxu0 %v508
    %1153 = vmatprep.subr.mxu0 %v505
    %1154 = vmatpush1.msra.mxu0 %v504
    %1155 = vmatprep.subr.mxu0 %v629
    %1156 = vmatpush2.msra.mxu0 %v628
    %1157 = vmatprep.subr.mxu0 %v625
    %1158 = vmatpush2.msra.mxu0 %v624
    %1159 = vmatprep.subr.mxu0 %v621
    %1160 = vmatpush2.msra.mxu0 %v620
    %1161 = vmatprep.subr.mxu0 %v617
    %1162 = vmatpush2.msra.mxu0 %v616
    %1163 = vmatprep.subr.mxu0 %v613
    %1164 = vmatpush2.msra.mxu0 %v612
    %1165 = vmatprep.subr.mxu0 %v609
    %1166 = vmatpush2.msra.mxu0 %v608
    %1167 = vmatprep.subr.mxu0 %v605
    %1168 = vmatpush2.msra.mxu0 %v604
    %1169 = vmatprep.subr.mxu0 %v601
    %1170 = vmatpush2.msra.mxu0 %v600
    %1171 = vmatprep.subr.mxu0 %v597
    %1172 = vmatpush2.msra.mxu0 %v596
    %1173 = vmatprep.subr.mxu0 %v593
    %1174 = vmatpush2.msra.mxu0 %v592
    %1175 = vmatprep.subr.mxu0 %v589
    %1176 = vmatpush2.msra.mxu0 %v588
    %1177 = vmatprep.subr.mxu0 %v585
    %1178 = vmatpush2.msra.mxu0 %v584
    %1179 = vmatprep.subr.mxu0 %v581
    %1180 = vmatpush2.msra.mxu0 %v580
    %1181 = vmatprep.subr.mxu0 %v577
    %1182 = vmatpush2.msra.mxu0 %v576
    %1183 = vmatprep.subr.mxu0 %v573
    %1184 = vmatpush2.msra.mxu0 %v572
    %1185 = vmatprep.subr.mxu0 %v569
    %1186 = vmatpush2.msra.mxu0 %v568
    %1187 = vmatprep.mubr.f32.mxu0 %v115
    %1188 = vmatmul.mubr.f32.gmra.mxu0 %v114
    %v1189 = vpop.f32.mrf.mxu0
    %v1190 = vadd.f32 %v1119, %v1189
    %v1191 = vpop.f32.mrf.mxu0
    %v1192 = vadd.f32 %v1121, %v1191
    %1193 = vdwg.mxu0
    %1194 = vmatprep.subr.mxu0 %v693
    %1195 = vmatpush1.msra.mxu0 %v692
    %1196 = vmatprep.subr.mxu0 %v689
    %1197 = vmatpush1.msra.mxu0 %v688
    %1198 = vmatprep.subr.mxu0 %v685
    %1199 = vmatpush1.msra.mxu0 %v684
    %1200 = vmatprep.subr.mxu0 %v681
    %1201 = vmatpush1.msra.mxu0 %v680
    %1202 = vmatprep.subr.mxu0 %v677
    %1203 = vmatpush1.msra.mxu0 %v676
    %1204 = vmatprep.subr.mxu0 %v673
    %1205 = vmatpush1.msra.mxu0 %v672
    %1206 = vmatprep.subr.mxu0 %v669
    %1207 = vmatpush1.msra.mxu0 %v668
    %1208 = vmatprep.subr.mxu0 %v665
    %1209 = vmatpush1.msra.mxu0 %v664
    %1210 = vmatprep.subr.mxu0 %v661
    %1211 = vmatpush1.msra.mxu0 %v660
    %1212 = vmatprep.subr.mxu0 %v657
    %1213 = vmatpush1.msra.mxu0 %v656
    %1214 = vmatprep.subr.mxu0 %v653
    %1215 = vmatpush1.msra.mxu0 %v652
    %1216 = vmatprep.subr.mxu0 %v649
    %1217 = vmatpush1.msra.mxu0 %v648
    %1218 = vmatprep.subr.mxu0 %v645
    %1219 = vmatpush1.msra.mxu0 %v644
    %1220 = vmatprep.subr.mxu0 %v641
    %1221 = vmatpush1.msra.mxu0 %v640
    %1222 = vmatprep.subr.mxu0 %v637
    %1223 = vmatpush1.msra.mxu0 %v636
    %1224 = vmatprep.subr.mxu0 %v633
    %1225 = vmatpush1.msra.mxu0 %v632
    %1226 = vmatprep.subr.mxu0 %v757
    %1227 = vmatpush2.msra.mxu0 %v756
    %1228 = vmatprep.subr.mxu0 %v753
    %1229 = vmatpush2.msra.mxu0 %v752
    %1230 = vmatprep.subr.mxu0 %v749
    %1231 = vmatpush2.msra.mxu0 %v748
    %1232 = vmatprep.subr.mxu0 %v745
    %1233 = vmatpush2.msra.mxu0 %v744
    %1234 = vmatprep.subr.mxu0 %v741
    %1235 = vmatpush2.msra.mxu0 %v740
    %1236 = vmatprep.subr.mxu0 %v737
    %1237 = vmatpush2.msra.mxu0 %v736
    %1238 = vmatprep.subr.mxu0 %v733
    %1239 = vmatpush2.msra.mxu0 %v732
    %1240 = vmatprep.subr.mxu0 %v729
    %1241 = vmatpush2.msra.mxu0 %v728
    %1242 = vmatprep.subr.mxu0 %v725
    %1243 = vmatpush2.msra.mxu0 %v724
    %1244 = vmatprep.subr.mxu0 %v721
    %1245 = vmatpush2.msra.mxu0 %v720
    %1246 = vmatprep.subr.mxu0 %v717
    %1247 = vmatpush2.msra.mxu0 %v716
    %1248 = vmatprep.subr.mxu0 %v713
    %1249 = vmatpush2.msra.mxu0 %v712
    %1250 = vmatprep.subr.mxu0 %v709
    %1251 = vmatpush2.msra.mxu0 %v708
    %1252 = vmatprep.subr.mxu0 %v705
    %1253 = vmatpush2.msra.mxu0 %v704
    %1254 = vmatprep.subr.mxu0 %v701
    %1255 = vmatpush2.msra.mxu0 %v700
    %1256 = vmatprep.subr.mxu0 %v697
    %1257 = vmatpush2.msra.mxu0 %v696
    %1258 = vmatprep.mubr.f32.mxu0 %v117
    %1259 = vmatmul.mubr.f32.gmra.mxu0 %v116
    %v1260 = vpop.f32.mrf.mxu0
    %v1261 = vadd.f32 %v1190, %v1260
    %v1262 = vpop.f32.mrf.mxu0
    %v1263 = vadd.f32 %v1192, %v1262
    %1264 = vdwg.mxu0
    %1265 = vmatprep.subr.mxu0 %v821
    %1266 = vmatpush1.msra.mxu0 %v820
    %1267 = vmatprep.subr.mxu0 %v817
    %1268 = vmatpush1.msra.mxu0 %v816
    %1269 = vmatprep.subr.mxu0 %v813
    %1270 = vmatpush1.msra.mxu0 %v812
    %1271 = vmatprep.subr.mxu0 %v809
    %1272 = vmatpush1.msra.mxu0 %v808
    %1273 = vmatprep.subr.mxu0 %v805
    %1274 = vmatpush1.msra.mxu0 %v804
    %1275 = vmatprep.subr.mxu0 %v801
    %1276 = vmatpush1.msra.mxu0 %v800
    %1277 = vmatprep.subr.mxu0 %v797
    %1278 = vmatpush1.msra.mxu0 %v796
    %1279 = vmatprep.subr.mxu0 %v793
    %1280 = vmatpush1.msra.mxu0 %v792
    %1281 = vmatprep.subr.mxu0 %v789
    %1282 = vmatpush1.msra.mxu0 %v788
    %1283 = vmatprep.subr.mxu0 %v785
    %1284 = vmatpush1.msra.mxu0 %v784
    %1285 = vmatprep.subr.mxu0 %v781
    %1286 = vmatpush1.msra.mxu0 %v780
    %1287 = vmatprep.subr.mxu0 %v777
    %1288 = vmatpush1.msra.mxu0 %v776
    %1289 = vmatprep.subr.mxu0 %v773
    %1290 = vmatpush1.msra.mxu0 %v772
    %1291 = vmatprep.subr.mxu0 %v769
    %1292 = vmatpush1.msra.mxu0 %v768
    %1293 = vmatprep.subr.mxu0 %v765
    %1294 = vmatpush1.msra.mxu0 %v764
    %1295 = vmatprep.subr.mxu0 %v761
    %1296 = vmatpush1.msra.mxu0 %v760
    %1297 = vmatprep.subr.mxu0 %v885
    %1298 = vmatpush2.msra.mxu0 %v884
    %1299 = vmatprep.subr.mxu0 %v881
    %1300 = vmatpush2.msra.mxu0 %v880
    %1301 = vmatprep.subr.mxu0 %v877
    %1302 = vmatpush2.msra.mxu0 %v876
    %1303 = vmatprep.subr.mxu0 %v873
    %1304 = vmatpush2.msra.mxu0 %v872
    %1305 = vmatprep.subr.mxu0 %v869
    %1306 = vmatpush2.msra.mxu0 %v868
    %1307 = vmatprep.subr.mxu0 %v865
    %1308 = vmatpush2.msra.mxu0 %v864
    %1309 = vmatprep.subr.mxu0 %v861
    %1310 = vmatpush2.msra.mxu0 %v860
    %1311 = vmatprep.subr.mxu0 %v857
    %1312 = vmatpush2.msra.mxu0 %v856
    %1313 = vmatprep.subr.mxu0 %v853
    %1314 = vmatpush2.msra.mxu0 %v852
    %1315 = vmatprep.subr.mxu0 %v849
    %1316 = vmatpush2.msra.mxu0 %v848
    %1317 = vmatprep.subr.mxu0 %v845
    %1318 = vmatpush2.msra.mxu0 %v844
    %1319 = vmatprep.subr.mxu0 %v841
    %1320 = vmatpush2.msra.mxu0 %v840
    %1321 = vmatprep.subr.mxu0 %v837
    %1322 = vmatpush2.msra.mxu0 %v836
    %1323 = vmatprep.subr.mxu0 %v833
    %1324 = vmatpush2.msra.mxu0 %v832
    %1325 = vmatprep.subr.mxu0 %v829
    %1326 = vmatpush2.msra.mxu0 %v828
    %1327 = vmatprep.subr.mxu0 %v825
    %1328 = vmatpush2.msra.mxu0 %v824
    %1329 = vmatprep.mubr.f32.mxu0 %v119
    %1330 = vmatmul.mubr.f32.gmra.mxu0 %v118
    %v1331 = vpop.f32.mrf.mxu0
    %v1332 = vadd.f32 %v1261, %v1331
    %v1333 = vpop.f32.mrf.mxu0
    %v1334 = vadd.f32 %v1263, %v1333
    %1335 = vdwg.mxu0
    %1336 = vmatprep.subr.mxu0 %v183
    %1337 = vmatpush1.msra.mxu0 %v182
    %1338 = vmatprep.subr.mxu0 %v179
    %1339 = vmatpush1.msra.mxu0 %v178
    %1340 = vmatprep.subr.mxu0 %v175
    %1341 = vmatpush1.msra.mxu0 %v174
    %1342 = vmatprep.subr.mxu0 %v171
    %1343 = vmatpush1.msra.mxu0 %v170
    %1344 = vmatprep.subr.mxu0 %v167
    %1345 = vmatpush1.msra.mxu0 %v166
    %1346 = vmatprep.subr.mxu0 %v163
    %1347 = vmatpush1.msra.mxu0 %v162
    %1348 = vmatprep.subr.mxu0 %v159
    %1349 = vmatpush1.msra.mxu0 %v158
    %1350 = vmatprep.subr.mxu0 %v155
    %1351 = vmatpush1.msra.mxu0 %v154
    %1352 = vmatprep.subr.mxu0 %v151
    %1353 = vmatpush1.msra.mxu0 %v150
    %1354 = vmatprep.subr.mxu0 %v147
    %1355 = vmatpush1.msra.mxu0 %v146
    %1356 = vmatprep.subr.mxu0 %v143
    %1357 = vmatpush1.msra.mxu0 %v142
    %1358 = vmatprep.subr.mxu0 %v139
    %1359 = vmatpush1.msra.mxu0 %v138
    %1360 = vmatprep.subr.mxu0 %v135
    %1361 = vmatpush1.msra.mxu0 %v134
    %1362 = vmatprep.subr.mxu0 %v131
    %1363 = vmatpush1.msra.mxu0 %v130
    %1364 = vmatprep.subr.mxu0 %v127
    %1365 = vmatpush1.msra.mxu0 %v126
    %1366 = vmatprep.subr.mxu0 %v123
    %1367 = vmatpush1.msra.mxu0 %v122
    %1368 = vmatprep.subr.mxu0 %v247
    %1369 = vmatpush2.msra.mxu0 %v246
    %1370 = vmatprep.subr.mxu0 %v243
    %1371 = vmatpush2.msra.mxu0 %v242
    %1372 = vmatprep.subr.mxu0 %v239
    %1373 = vmatpush2.msra.mxu0 %v238
    %1374 = vmatprep.subr.mxu0 %v235
    %1375 = vmatpush2.msra.mxu0 %v234
    %1376 = vmatprep.subr.mxu0 %v231
    %1377 = vmatpush2.msra.mxu0 %v230
    %1378 = vmatprep.subr.mxu0 %v227
    %1379 = vmatpush2.msra.mxu0 %v226
    %1380 = vmatprep.subr.mxu0 %v223
    %1381 = vmatpush2.msra.mxu0 %v222
    %1382 = vmatprep.subr.mxu0 %v219
    %1383 = vmatpush2.msra.mxu0 %v218
    %1384 = vmatprep.subr.mxu0 %v215
    %1385 = vmatpush2.msra.mxu0 %v214
    %1386 = vmatprep.subr.mxu0 %v211
    %1387 = vmatpush2.msra.mxu0 %v210
    %1388 = vmatprep.subr.mxu0 %v207
    %1389 = vmatpush2.msra.mxu0 %v206
    %1390 = vmatprep.subr.mxu0 %v203
    %1391 = vmatpush2.msra.mxu0 %v202
    %1392 = vmatprep.subr.mxu0 %v199
    %1393 = vmatpush2.msra.mxu0 %v198
    %1394 = vmatprep.subr.mxu0 %v195
    %1395 = vmatpush2.msra.mxu0 %v194
    %1396 = vmatprep.subr.mxu0 %v191
    %1397 = vmatpush2.msra.mxu0 %v190
    %1398 = vmatprep.subr.mxu0 %v187
    %1399 = vmatpush2.msra.mxu0 %v186
    %1400 = vmatprep.mubr.f32.mxu0 %v109
    %1401 = vmatmul.mubr.f32.gmra.mxu0 %v108
    %v1402 = vpop.f32.mrf.mxu0
    %v1403 = vadd.f32 %v901, %v1402
    %v1404 = vpop.f32.mrf.mxu0
    %v1405 = vadd.f32 %v905, %v1404
    %1406 = vdwg.mxu0
    %1407 = vmatprep.subr.mxu0 %v311
    %1408 = vmatpush1.msra.mxu0 %v310
    %1409 = vmatprep.subr.mxu0 %v307
    %1410 = vmatpush1.msra.mxu0 %v306
    %1411 = vmatprep.subr.mxu0 %v303
    %1412 = vmatpush1.msra.mxu0 %v302
    %1413 = vmatprep.subr.mxu0 %v299
    %1414 = vmatpush1.msra.mxu0 %v298
    %1415 = vmatprep.subr.mxu0 %v295
    %1416 = vmatpush1.msra.mxu0 %v294
    %1417 = vmatprep.subr.mxu0 %v291
    %1418 = vmatpush1.msra.mxu0 %v290
    %1419 = vmatprep.subr.mxu0 %v287
    %1420 = vmatpush1.msra.mxu0 %v286
    %1421 = vmatprep.subr.mxu0 %v283
    %1422 = vmatpush1.msra.mxu0 %v282
    %1423 = vmatprep.subr.mxu0 %v279
    %1424 = vmatpush1.msra.mxu0 %v278
    %1425 = vmatprep.subr.mxu0 %v275
    %1426 = vmatpush1.msra.mxu0 %v274
    %1427 = vmatprep.subr.mxu0 %v271
    %1428 = vmatpush1.msra.mxu0 %v270
    %1429 = vmatprep.subr.mxu0 %v267
    %1430 = vmatpush1.msra.mxu0 %v266
    %1431 = vmatprep.subr.mxu0 %v263
    %1432 = vmatpush1.msra.mxu0 %v262
    %1433 = vmatprep.subr.mxu0 %v259
    %1434 = vmatpush1.msra.mxu0 %v258
    %1435 = vmatprep.subr.mxu0 %v255
    %1436 = vmatpush1.msra.mxu0 %v254
    %1437 = vmatprep.subr.mxu0 %v251
    %1438 = vmatpush1.msra.mxu0 %v250
    %1439 = vmatprep.subr.mxu0 %v375
    %1440 = vmatpush2.msra.mxu0 %v374
    %1441 = vmatprep.subr.mxu0 %v371
    %1442 = vmatpush2.msra.mxu0 %v370
    %1443 = vmatprep.subr.mxu0 %v367
    %1444 = vmatpush2.msra.mxu0 %v366
    %1445 = vmatprep.subr.mxu0 %v363
    %1446 = vmatpush2.msra.mxu0 %v362
    %1447 = vmatprep.subr.mxu0 %v359
    %1448 = vmatpush2.msra.mxu0 %v358
    %1449 = vmatprep.subr.mxu0 %v355
    %1450 = vmatpush2.msra.mxu0 %v354
    %1451 = vmatprep.subr.mxu0 %v351
    %1452 = vmatpush2.msra.mxu0 %v350
    %1453 = vmatprep.subr.mxu0 %v347
    %1454 = vmatpush2.msra.mxu0 %v346
    %1455 = vmatprep.subr.mxu0 %v343
    %1456 = vmatpush2.msra.mxu0 %v342
    %1457 = vmatprep.subr.mxu0 %v339
    %1458 = vmatpush2.msra.mxu0 %v338
    %1459 = vmatprep.subr.mxu0 %v335
    %1460 = vmatpush2.msra.mxu0 %v334
    %1461 = vmatprep.subr.mxu0 %v331
    %1462 = vmatpush2.msra.mxu0 %v330
    %1463 = vmatprep.subr.mxu0 %v327
    %1464 = vmatpush2.msra.mxu0 %v326
    %1465 = vmatprep.subr.mxu0 %v323
    %1466 = vmatpush2.msra.mxu0 %v322
    %1467 = vmatprep.subr.mxu0 %v319
    %1468 = vmatpush2.msra.mxu0 %v318
    %1469 = vmatprep.subr.mxu0 %v315
    %1470 = vmatpush2.msra.mxu0 %v314
    %1471 = vmatprep.mubr.f32.mxu0 %v111
    %1472 = vmatmul.mubr.f32.gmra.mxu0 %v110
    %v1473 = vpop.f32.mrf.mxu0
    %v1474 = vadd.f32 %v1403, %v1473
    %v1475 = vpop.f32.mrf.mxu0
    %v1476 = vadd.f32 %v1405, %v1475
    %1477 = vdwg.mxu0
    %1478 = vmatprep.subr.mxu0 %v439
    %1479 = vmatpush1.msra.mxu0 %v438
    %1480 = vmatprep.subr.mxu0 %v435
    %1481 = vmatpush1.msra.mxu0 %v434
    %1482 = vmatprep.subr.mxu0 %v431
    %1483 = vmatpush1.msra.mxu0 %v430
    %1484 = vmatprep.subr.mxu0 %v427
    %1485 = vmatpush1.msra.mxu0 %v426
    %1486 = vmatprep.subr.mxu0 %v423
    %1487 = vmatpush1.msra.mxu0 %v422
    %1488 = vmatprep.subr.mxu0 %v419
    %1489 = vmatpush1.msra.mxu0 %v418
    %1490 = vmatprep.subr.mxu0 %v415
    %1491 = vmatpush1.msra.mxu0 %v414
    %1492 = vmatprep.subr.mxu0 %v411
    %1493 = vmatpush1.msra.mxu0 %v410
    %1494 = vmatprep.subr.mxu0 %v407
    %1495 = vmatpush1.msra.mxu0 %v406
    %1496 = vmatprep.subr.mxu0 %v403
    %1497 = vmatpush1.msra.mxu0 %v402
    %1498 = vmatprep.subr.mxu0 %v399
    %1499 = vmatpush1.msra.mxu0 %v398
    %1500 = vmatprep.subr.mxu0 %v395
    %1501 = vmatpush1.msra.mxu0 %v394
    %1502 = vmatprep.subr.mxu0 %v391
    %1503 = vmatpush1.msra.mxu0 %v390
    %1504 = vmatprep.subr.mxu0 %v387
    %1505 = vmatpush1.msra.mxu0 %v386
    %1506 = vmatprep.subr.mxu0 %v383
    %1507 = vmatpush1.msra.mxu0 %v382
    %1508 = vmatprep.subr.mxu0 %v379
    %1509 = vmatpush1.msra.mxu0 %v378
    %1510 = vmatprep.subr.mxu0 %v503
    %1511 = vmatpush2.msra.mxu0 %v502
    %1512 = vmatprep.subr.mxu0 %v499
    %1513 = vmatpush2.msra.mxu0 %v498
    %1514 = vmatprep.subr.mxu0 %v495
    %1515 = vmatpush2.msra.mxu0 %v494
    %1516 = vmatprep.subr.mxu0 %v491
    %1517 = vmatpush2.msra.mxu0 %v490
    %1518 = vmatprep.subr.mxu0 %v487
    %1519 = vmatpush2.msra.mxu0 %v486
    %1520 = vmatprep.subr.mxu0 %v483
    %1521 = vmatpush2.msra.mxu0 %v482
    %1522 = vmatprep.subr.mxu0 %v479
    %1523 = vmatpush2.msra.mxu0 %v478
    %1524 = vmatprep.subr.mxu0 %v475
    %1525 = vmatpush2.msra.mxu0 %v474
    %1526 = vmatprep.subr.mxu0 %v471
    %1527 = vmatpush2.msra.mxu0 %v470
    %1528 = vmatprep.subr.mxu0 %v467
    %1529 = vmatpush2.msra.mxu0 %v466
    %1530 = vmatprep.subr.mxu0 %v463
    %1531 = vmatpush2.msra.mxu0 %v462
    %1532 = vmatprep.subr.mxu0 %v459
    %1533 = vmatpush2.msra.mxu0 %v458
    %1534 = vmatprep.subr.mxu0 %v455
    %1535 = vmatpush2.msra.mxu0 %v454
    %1536 = vmatprep.subr.mxu0 %v451
    %1537 = vmatpush2.msra.mxu0 %v450
    %1538 = vmatprep.subr.mxu0 %v447
    %1539 = vmatpush2.msra.mxu0 %v446
    %1540 = vmatprep.subr.mxu0 %v443
    %1541 = vmatpush2.msra.mxu0 %v442
    %1542 = vmatprep.mubr.f32.mxu0 %v113
    %1543 = vmatmul.mubr.f32.gmra.mxu0 %v112
    %v1544 = vpop.f32.mrf.mxu0
    %v1545 = vadd.f32 %v1474, %v1544
    %v1546 = vpop.f32.mrf.mxu0
    %v1547 = vadd.f32 %v1476, %v1546
    %1548 = vdwg.mxu0
    %1549 = vmatprep.subr.mxu0 %v567
    %1550 = vmatpush1.msra.mxu0 %v566
    %1551 = vmatprep.subr.mxu0 %v563
    %1552 = vmatpush1.msra.mxu0 %v562
    %1553 = vmatprep.subr.mxu0 %v559
    %1554 = vmatpush1.msra.mxu0 %v558
    %1555 = vmatprep.subr.mxu0 %v555
    %1556 = vmatpush1.msra.mxu0 %v554
    %1557 = vmatprep.subr.mxu0 %v551
    %1558 = vmatpush1.msra.mxu0 %v550
    %1559 = vmatprep.subr.mxu0 %v547
    %1560 = vmatpush1.msra.mxu0 %v546
    %1561 = vmatprep.subr.mxu0 %v543
    %1562 = vmatpush1.msra.mxu0 %v542
    %1563 = vmatprep.subr.mxu0 %v539
    %1564 = vmatpush1.msra.mxu0 %v538
    %1565 = vmatprep.subr.mxu0 %v535
    %1566 = vmatpush1.msra.mxu0 %v534
    %1567 = vmatprep.subr.mxu0 %v531
    %1568 = vmatpush1.msra.mxu0 %v530
    %1569 = vmatprep.subr.mxu0 %v527
    %1570 = vmatpush1.msra.mxu0 %v526
    %1571 = vmatprep.subr.mxu0 %v523
    %1572 = vmatpush1.msra.mxu0 %v522
    %1573 = vmatprep.subr.mxu0 %v519
    %1574 = vmatpush1.msra.mxu0 %v518
    %1575 = vmatprep.subr.mxu0 %v515
    %1576 = vmatpush1.msra.mxu0 %v514
    %1577 = vmatprep.subr.mxu0 %v511
    %1578 = vmatpush1.msra.mxu0 %v510
    %1579 = vmatprep.subr.mxu0 %v507
    %1580 = vmatpush1.msra.mxu0 %v506
    %1581 = vmatprep.subr.mxu0 %v631
    %1582 = vmatpush2.msra.mxu0 %v630
    %1583 = vmatprep.subr.mxu0 %v627
    %1584 = vmatpush2.msra.mxu0 %v626
    %1585 = vmatprep.subr.mxu0 %v623
    %1586 = vmatpush2.msra.mxu0 %v622
    %1587 = vmatprep.subr.mxu0 %v619
    %1588 = vmatpush2.msra.mxu0 %v618
    %1589 = vmatprep.subr.mxu0 %v615
    %1590 = vmatpush2.msra.mxu0 %v614
    %1591 = vmatprep.subr.mxu0 %v611
    %1592 = vmatpush2.msra.mxu0 %v610
    %1593 = vmatprep.subr.mxu0 %v607
    %1594 = vmatpush2.msra.mxu0 %v606
    %1595 = vmatprep.subr.mxu0 %v603
    %1596 = vmatpush2.msra.mxu0 %v602
    %1597 = vmatprep.subr.mxu0 %v599
    %1598 = vmatpush2.msra.mxu0 %v598
    %1599 = vmatprep.subr.mxu0 %v595
    %1600 = vmatpush2.msra.mxu0 %v594
    %1601 = vmatprep.subr.mxu0 %v591
    %1602 = vmatpush2.msra.mxu0 %v590
    %1603 = vmatprep.subr.mxu0 %v587
    %1604 = vmatpush2.msra.mxu0 %v586
    %1605 = vmatprep.subr.mxu0 %v583
    %1606 = vmatpush2.msra.mxu0 %v582
    %1607 = vmatprep.subr.mxu0 %v579
    %1608 = vmatpush2.msra.mxu0 %v578
    %1609 = vmatprep.subr.mxu0 %v575
    %1610 = vmatpush2.msra.mxu0 %v574
    %1611 = vmatprep.subr.mxu0 %v571
    %1612 = vmatpush2.msra.mxu0 %v570
    %1613 = vmatprep.mubr.f32.mxu0 %v115
    %1614 = vmatmul.mubr.f32.gmra.mxu0 %v114
    %v1615 = vpop.f32.mrf.mxu0
    %v1616 = vadd.f32 %v1545, %v1615
    %v1617 = vpop.f32.mrf.mxu0
    %v1618 = vadd.f32 %v1547, %v1617
    %1619 = vdwg.mxu0
    %1620 = vmatprep.subr.mxu0 %v695
    %1621 = vmatpush1.msra.mxu0 %v694
    %1622 = vmatprep.subr.mxu0 %v691
    %1623 = vmatpush1.msra.mxu0 %v690
    %1624 = vmatprep.subr.mxu0 %v687
    %1625 = vmatpush1.msra.mxu0 %v686
    %1626 = vmatprep.subr.mxu0 %v683
    %1627 = vmatpush1.msra.mxu0 %v682
    %1628 = vmatprep.subr.mxu0 %v679
    %1629 = vmatpush1.msra.mxu0 %v678
    %1630 = vmatprep.subr.mxu0 %v675
    %1631 = vmatpush1.msra.mxu0 %v674
    %1632 = vmatprep.subr.mxu0 %v671
    %1633 = vmatpush1.msra.mxu0 %v670
    %1634 = vmatprep.subr.mxu0 %v667
    %1635 = vmatpush1.msra.mxu0 %v666
    %1636 = vmatprep.subr.mxu0 %v663
    %1637 = vmatpush1.msra.mxu0 %v662
    %1638 = vmatprep.subr.mxu0 %v659
    %1639 = vmatpush1.msra.mxu0 %v658
    %1640 = vmatprep.subr.mxu0 %v655
    %1641 = vmatpush1.msra.mxu0 %v654
    %1642 = vmatprep.subr.mxu0 %v651
    %1643 = vmatpush1.msra.mxu0 %v650
    %1644 = vmatprep.subr.mxu0 %v647
    %1645 = vmatpush1.msra.mxu0 %v646
    %1646 = vmatprep.subr.mxu0 %v643
    %1647 = vmatpush1.msra.mxu0 %v642
    %1648 = vmatprep.subr.mxu0 %v639
    %1649 = vmatpush1.msra.mxu0 %v638
    %1650 = vmatprep.subr.mxu0 %v635
    %1651 = vmatpush1.msra.mxu0 %v634
    %1652 = vmatprep.subr.mxu0 %v759
    %1653 = vmatpush2.msra.mxu0 %v758
    %1654 = vmatprep.subr.mxu0 %v755
    %1655 = vmatpush2.msra.mxu0 %v754
    %1656 = vmatprep.subr.mxu0 %v751
    %1657 = vmatpush2.msra.mxu0 %v750
    %1658 = vmatprep.subr.mxu0 %v747
    %1659 = vmatpush2.msra.mxu0 %v746
    %1660 = vmatprep.subr.mxu0 %v743
    %1661 = vmatpush2.msra.mxu0 %v742
    %1662 = vmatprep.subr.mxu0 %v739
    %1663 = vmatpush2.msra.mxu0 %v738
    %1664 = vmatprep.subr.mxu0 %v735
    %1665 = vmatpush2.msra.mxu0 %v734
    %1666 = vmatprep.subr.mxu0 %v731
    %1667 = vmatpush2.msra.mxu0 %v730
    %1668 = vmatprep.subr.mxu0 %v727
    %1669 = vmatpush2.msra.mxu0 %v726
    %1670 = vmatprep.subr.mxu0 %v723
    %1671 = vmatpush2.msra.mxu0 %v722
    %1672 = vmatprep.subr.mxu0 %v719
    %1673 = vmatpush2.msra.mxu0 %v718
    %1674 = vmatprep.subr.mxu0 %v715
    %1675 = vmatpush2.msra.mxu0 %v714
    %1676 = vmatprep.subr.mxu0 %v711
    %1677 = vmatpush2.msra.mxu0 %v710
    %1678 = vmatprep.subr.mxu0 %v707
    %1679 = vmatpush2.msra.mxu0 %v706
    %1680 = vmatprep.subr.mxu0 %v703
    %1681 = vmatpush2.msra.mxu0 %v702
    %1682 = vmatprep.subr.mxu0 %v699
    %1683 = vmatpush2.msra.mxu0 %v698
    %1684 = vmatprep.mubr.f32.mxu0 %v117
    %1685 = vmatmul.mubr.f32.gmra.mxu0 %v116
    %v1686 = vpop.f32.mrf.mxu0
    %v1687 = vadd.f32 %v1616, %v1686
    %v1688 = vpop.f32.mrf.mxu0
    %v1689 = vadd.f32 %v1618, %v1688
    %1690 = vdwg.mxu0
    %1691 = vmatprep.subr.mxu0 %v823
    %1692 = vmatpush1.msra.mxu0 %v822
    %1693 = vmatprep.subr.mxu0 %v819
    %1694 = vmatpush1.msra.mxu0 %v818
    %1695 = vmatprep.subr.mxu0 %v815
    %1696 = vmatpush1.msra.mxu0 %v814
    %1697 = vmatprep.subr.mxu0 %v811
    %1698 = vmatpush1.msra.mxu0 %v810
    %1699 = vmatprep.subr.mxu0 %v807
    %1700 = vmatpush1.msra.mxu0 %v806
    %1701 = vmatprep.subr.mxu0 %v803
    %1702 = vmatpush1.msra.mxu0 %v802
    %1703 = vmatprep.subr.mxu0 %v799
    %1704 = vmatpush1.msra.mxu0 %v798
    %1705 = vmatprep.subr.mxu0 %v795
    %1706 = vmatpush1.msra.mxu0 %v794
    %1707 = vmatprep.subr.mxu0 %v791
    %1708 = vmatpush1.msra.mxu0 %v790
    %1709 = vmatprep.subr.mxu0 %v787
    %1710 = vmatpush1.msra.mxu0 %v786
    %1711 = vmatprep.subr.mxu0 %v783
    %1712 = vmatpush1.msra.mxu0 %v782
    %1713 = vmatprep.subr.mxu0 %v779
    %1714 = vmatpush1.msra.mxu0 %v778
    %1715 = vmatprep.subr.mxu0 %v775
    %1716 = vmatpush1.msra.mxu0 %v774
    %1717 = vmatprep.subr.mxu0 %v771
    %1718 = vmatpush1.msra.mxu0 %v770
    %1719 = vmatprep.subr.mxu0 %v767
    %1720 = vmatpush1.msra.mxu0 %v766
    %1721 = vmatprep.subr.mxu0 %v763
    %1722 = vmatpush1.msra.mxu0 %v762
    %1723 = vmatprep.subr.mxu0 %v887
    %1724 = vmatpush2.msra.mxu0 %v886
    %1725 = vmatprep.subr.mxu0 %v883
    %1726 = vmatpush2.msra.mxu0 %v882
    %1727 = vmatprep.subr.mxu0 %v879
    %1728 = vmatpush2.msra.mxu0 %v878
    %1729 = vmatprep.subr.mxu0 %v875
    %1730 = vmatpush2.msra.mxu0 %v874
    %1731 = vmatprep.subr.mxu0 %v871
    %1732 = vmatpush2.msra.mxu0 %v870
    %1733 = vmatprep.subr.mxu0 %v867
    %1734 = vmatpush2.msra.mxu0 %v866
    %1735 = vmatprep.subr.mxu0 %v863
    %1736 = vmatpush2.msra.mxu0 %v862
    %1737 = vmatprep.subr.mxu0 %v859
    %1738 = vmatpush2.msra.mxu0 %v858
    %1739 = vmatprep.subr.mxu0 %v855
    %1740 = vmatpush2.msra.mxu0 %v854
    %1741 = vmatprep.subr.mxu0 %v851
    %1742 = vmatpush2.msra.mxu0 %v850
    %1743 = vmatprep.subr.mxu0 %v847
    %1744 = vmatpush2.msra.mxu0 %v846
    %1745 = vmatprep.subr.mxu0 %v843
    %1746 = vmatpush2.msra.mxu0 %v842
    %1747 = vmatprep.subr.mxu0 %v839
    %1748 = vmatpush2.msra.mxu0 %v838
    %1749 = vmatprep.subr.mxu0 %v835
    %1750 = vmatpush2.msra.mxu0 %v834
    %1751 = vmatprep.subr.mxu0 %v831
    %1752 = vmatpush2.msra.mxu0 %v830
    %1753 = vmatprep.subr.mxu0 %v827
    %1754 = vmatpush2.msra.mxu0 %v826
    %1755 = vmatprep.mubr.f32.mxu0 %v119
    %1756 = vmatmul.mubr.f32.gmra.mxu0 %v118
    %v1757 = vpop.f32.mrf.mxu0
    %v1758 = vadd.f32 %v1687, %v1757
    %v1759 = vpop.f32.mrf.mxu0
    %v1760 = vadd.f32 %v1689, %v1759
    %1761 = vdwg.mxu0
    %v1762 = vmax.f32 %v1332, 0.0
    %v1763 = vmax.f32 %v1334, 0.0
    %v1764 = vmax.f32 %v1758, 0.0
    %v1765 = vmax.f32 %v1760, 0.0
    %v1766 = vld [vmem:[#allocation8] sm:$0xff]
    %v1767 = vld [vmem:[#allocation8 + $0x8] sm:$0xff]
    %v1768 = vld [vmem:[#allocation8 + $0x10] sm:$0xff]
    %v1769 = vld [vmem:[#allocation8 + $0x18] sm:$0xff]
    %v1770 = vld [vmem:[#allocation8 + $0x20] sm:$0xff]
    %v1771 = vld [vmem:[#allocation8 + $0x28] sm:$0xff]
    %v1772 = vld [vmem:[#allocation8 + $0x30] sm:$0xff]
    %v1773 = vld [vmem:[#allocation8 + $0x38] sm:$0xff]
    %v1774 = vld [vmem:[#allocation8 + $0x40] sm:$0xff]
    %v1775 = vld [vmem:[#allocation8 + $0x48] sm:$0xff]
    %v1776 = vld [vmem:[#allocation8 + $0x50] sm:$0xff]
    %v1777 = vld [vmem:[#allocation8 + $0x58] sm:$0xff]
    %v1778 = vld [vmem:[#allocation8 + $0x60] sm:$0xff]
    %v1779 = vld [vmem:[#allocation8 + $0x68] sm:$0xff]
    %v1780 = vld [vmem:[#allocation8 + $0x70] sm:$0xff]
    %v1781 = vld [vmem:[#allocation8 + $0x78] sm:$0xff]
    %v1782 = vld [vmem:[#allocation8 + $0x80] sm:$0xff]
    %v1783 = vld [vmem:[#allocation8 + $0x88] sm:$0xff]
    %v1784 = vld [vmem:[#allocation8 + $0x90] sm:$0xff]
    %v1785 = vld [vmem:[#allocation8 + $0x98] sm:$0xff]
    %v1786 = vld [vmem:[#allocation8 + $0xa0] sm:$0xff]
    %v1787 = vld [vmem:[#allocation8 + $0xa8] sm:$0xff]
    %v1788 = vld [vmem:[#allocation8 + $0xb0] sm:$0xff]
    %v1789 = vld [vmem:[#allocation8 + $0xb8] sm:$0xff]
    %v1790 = vld [vmem:[#allocation8 + $0xc0] sm:$0xff]
    %v1791 = vld [vmem:[#allocation8 + $0xc8] sm:$0xff]
    %v1792 = vld [vmem:[#allocation8 + $0xd0] sm:$0xff]
    %v1793 = vld [vmem:[#allocation8 + $0xd8] sm:$0xff]
    %v1794 = vld [vmem:[#allocation8 + $0xe0] sm:$0xff]
    %v1795 = vld [vmem:[#allocation8 + $0xe8] sm:$0xff]
    %v1796 = vld [vmem:[#allocation8 + $0xf0] sm:$0xff]
    %v1797 = vld [vmem:[#allocation8 + $0xf8] sm:$0xff]
    %v1798 = vld [vmem:[#allocation8 + $0x100] sm:$0xff]
    %v1799 = vld [vmem:[#allocation8 + $0x108] sm:$0xff]
    %v1800 = vld [vmem:[#allocation8 + $0x110] sm:$0xff]
    %v1801 = vld [vmem:[#allocation8 + $0x118] sm:$0xff]
    %v1802 = vld [vmem:[#allocation8 + $0x120] sm:$0xff]
    %v1803 = vld [vmem:[#allocation8 + $0x128] sm:$0xff]
    %v1804 = vld [vmem:[#allocation8 + $0x130] sm:$0xff]
    %v1805 = vld [vmem:[#allocation8 + $0x138] sm:$0xff]
    %v1806 = vld [vmem:[#allocation8 + $0x140] sm:$0xff]
    %v1807 = vld [vmem:[#allocation8 + $0x148] sm:$0xff]
    %v1808 = vld [vmem:[#allocation8 + $0x150] sm:$0xff]
    %v1809 = vld [vmem:[#allocation8 + $0x158] sm:$0xff]
    %v1810 = vld [vmem:[#allocation8 + $0x160] sm:$0xff]
    %v1811 = vld [vmem:[#allocation8 + $0x168] sm:$0xff]
    %v1812 = vld [vmem:[#allocation8 + $0x170] sm:$0xff]
    %v1813 = vld [vmem:[#allocation8 + $0x178] sm:$0xff]
    %v1814 = vld [vmem:[#allocation8 + $0x180] sm:$0xff]
    %v1815 = vld [vmem:[#allocation8 + $0x188] sm:$0xff]
    %v1816 = vld [vmem:[#allocation8 + $0x190] sm:$0xff]
    %v1817 = vld [vmem:[#allocation8 + $0x198] sm:$0xff]
    %v1818 = vld [vmem:[#allocation8 + $0x1a0] sm:$0xff]
    %v1819 = vld [vmem:[#allocation8 + $0x1a8] sm:$0xff]
    %v1820 = vld [vmem:[#allocation8 + $0x1b0] sm:$0xff]
    %v1821 = vld [vmem:[#allocation8 + $0x1b8] sm:$0xff]
    %v1822 = vld [vmem:[#allocation8 + $0x1c0] sm:$0xff]
    %v1823 = vld [vmem:[#allocation8 + $0x1c8] sm:$0xff]
    %v1824 = vld [vmem:[#allocation8 + $0x1d0] sm:$0xff]
    %v1825 = vld [vmem:[#allocation8 + $0x1d8] sm:$0xff]
    %v1826 = vld [vmem:[#allocation8 + $0x1e0] sm:$0xff]
    %v1827 = vld [vmem:[#allocation8 + $0x1e8] sm:$0xff]
    %v1828 = vld [vmem:[#allocation8 + $0x1f0] sm:$0xff]
    %v1829 = vld [vmem:[#allocation8 + $0x1f8] sm:$0xff]
    %v1830 = vld [vmem:[#allocation8 + $0x200] sm:$0xff]
    %v1831 = vld [vmem:[#allocation8 + $0x208] sm:$0xff]
    %v1832 = vld [vmem:[#allocation8 + $0x210] sm:$0xff]
    %v1833 = vld [vmem:[#allocation8 + $0x218] sm:$0xff]
    %v1834 = vld [vmem:[#allocation8 + $0x220] sm:$0xff]
    %v1835 = vld [vmem:[#allocation8 + $0x228] sm:$0xff]
    %v1836 = vld [vmem:[#allocation8 + $0x230] sm:$0xff]
    %v1837 = vld [vmem:[#allocation8 + $0x238] sm:$0xff]
    %v1838 = vld [vmem:[#allocation8 + $0x240] sm:$0xff]
    %v1839 = vld [vmem:[#allocation8 + $0x248] sm:$0xff]
    %v1840 = vld [vmem:[#allocation8 + $0x250] sm:$0xff]
    %v1841 = vld [vmem:[#allocation8 + $0x258] sm:$0xff]
    %v1842 = vld [vmem:[#allocation8 + $0x260] sm:$0xff]
    %v1843 = vld [vmem:[#allocation8 + $0x268] sm:$0xff]
    %v1844 = vld [vmem:[#allocation8 + $0x270] sm:$0xff]
    %v1845 = vld [vmem:[#allocation8 + $0x278] sm:$0xff]
    %v1846 = vld [vmem:[#allocation8 + $0x280] sm:$0xff]
    %v1847 = vld [vmem:[#allocation8 + $0x288] sm:$0xff]
    %v1848 = vld [vmem:[#allocation8 + $0x290] sm:$0xff]
    %v1849 = vld [vmem:[#allocation8 + $0x298] sm:$0xff]
    %v1850 = vld [vmem:[#allocation8 + $0x2a0] sm:$0xff]
    %v1851 = vld [vmem:[#allocation8 + $0x2a8] sm:$0xff]
    %v1852 = vld [vmem:[#allocation8 + $0x2b0] sm:$0xff]
    %v1853 = vld [vmem:[#allocation8 + $0x2b8] sm:$0xff]
    %v1854 = vld [vmem:[#allocation8 + $0x2c0] sm:$0xff]
    %v1855 = vld [vmem:[#allocation8 + $0x2c8] sm:$0xff]
    %v1856 = vld [vmem:[#allocation8 + $0x2d0] sm:$0xff]
    %v1857 = vld [vmem:[#allocation8 + $0x2d8] sm:$0xff]
    %v1858 = vld [vmem:[#allocation8 + $0x2e0] sm:$0xff]
    %v1859 = vld [vmem:[#allocation8 + $0x2e8] sm:$0xff]
    %v1860 = vld [vmem:[#allocation8 + $0x2f0] sm:$0xff]
    %v1861 = vld [vmem:[#allocation8 + $0x2f8] sm:$0xff]
    %v1862 = vld [vmem:[#allocation8 + $0x300] sm:$0xff]
    %v1863 = vld [vmem:[#allocation8 + $0x308] sm:$0xff]
    %v1864 = vld [vmem:[#allocation8 + $0x310] sm:$0xff]
    %v1865 = vld [vmem:[#allocation8 + $0x318] sm:$0xff]
    %v1866 = vld [vmem:[#allocation8 + $0x320] sm:$0xff]
    %v1867 = vld [vmem:[#allocation8 + $0x328] sm:$0xff]
    %v1868 = vld [vmem:[#allocation8 + $0x330] sm:$0xff]
    %v1869 = vld [vmem:[#allocation8 + $0x338] sm:$0xff]
    %v1870 = vld [vmem:[#allocation8 + $0x340] sm:$0xff]
    %v1871 = vld [vmem:[#allocation8 + $0x348] sm:$0xff]
    %v1872 = vld [vmem:[#allocation8 + $0x350] sm:$0xff]
    %v1873 = vld [vmem:[#allocation8 + $0x358] sm:$0xff]
    %v1874 = vld [vmem:[#allocation8 + $0x360] sm:$0xff]
    %v1875 = vld [vmem:[#allocation8 + $0x368] sm:$0xff]
    %v1876 = vld [vmem:[#allocation8 + $0x370] sm:$0xff]
    %v1877 = vld [vmem:[#allocation8 + $0x378] sm:$0xff]
    %v1878 = vld [vmem:[#allocation8 + $0x380] sm:$0xff]
    %v1879 = vld [vmem:[#allocation8 + $0x388] sm:$0xff]
    %v1880 = vld [vmem:[#allocation8 + $0x390] sm:$0xff]
    %v1881 = vld [vmem:[#allocation8 + $0x398] sm:$0xff]
    %v1882 = vld [vmem:[#allocation8 + $0x3a0] sm:$0xff]
    %v1883 = vld [vmem:[#allocation8 + $0x3a8] sm:$0xff]
    %v1884 = vld [vmem:[#allocation8 + $0x3b0] sm:$0xff]
    %v1885 = vld [vmem:[#allocation8 + $0x3b8] sm:$0xff]
    %v1886 = vld [vmem:[#allocation8 + $0x3c0] sm:$0xff]
    %v1887 = vld [vmem:[#allocation8 + $0x3c8] sm:$0xff]
    %v1888 = vld [vmem:[#allocation8 + $0x3d0] sm:$0xff]
    %v1889 = vld [vmem:[#allocation8 + $0x3d8] sm:$0xff]
    %v1890 = vld [vmem:[#allocation8 + $0x3e0] sm:$0xff]
    %v1891 = vld [vmem:[#allocation8 + $0x3e8] sm:$0xff]
    %v1892 = vld [vmem:[#allocation8 + $0x3f0] sm:$0xff]
    %v1893 = vld [vmem:[#allocation8 + $0x3f8] sm:$0xff]
    %v1894 = vld [vmem:[#allocation10] sm:$0x3]
    %v1896 = vlaneseq
    %v1897 = vshrl.u32 %v1896, 7
    %v1898 = vsub.s32 0, %v1897
    %v1899 = vrot.slane %v1894, %v1898
    %v1900 = vlaneseq
    %v1901 = vshrl.u32 %v1900, 7
    %v1902 = vsub.s32 1, %v1901
    %v1903 = vrot.slane %v1894, %v1902
    %1906 = vmatprep.subr.mxu0 %v1797
    %1907 = vmatpush1.msra.mxu0 %v1796
    %1908 = vmatprep.subr.mxu0 %v1795
    %1909 = vmatpush1.msra.mxu0 %v1794
    %1910 = vmatprep.subr.mxu0 %v1793
    %1911 = vmatpush1.msra.mxu0 %v1792
    %1912 = vmatprep.subr.mxu0 %v1791
    %1913 = vmatpush1.msra.mxu0 %v1790
    %1914 = vmatprep.subr.mxu0 %v1789
    %1915 = vmatpush1.msra.mxu0 %v1788
    %1916 = vmatprep.subr.mxu0 %v1787
    %1917 = vmatpush1.msra.mxu0 %v1786
    %1918 = vmatprep.subr.mxu0 %v1785
    %1919 = vmatpush1.msra.mxu0 %v1784
    %1920 = vmatprep.subr.mxu0 %v1783
    %1921 = vmatpush1.msra.mxu0 %v1782
    %1922 = vmatprep.subr.mxu0 %v1781
    %1923 = vmatpush1.msra.mxu0 %v1780
    %1924 = vmatprep.subr.mxu0 %v1779
    %1925 = vmatpush1.msra.mxu0 %v1778
    %1926 = vmatprep.subr.mxu0 %v1777
    %1927 = vmatpush1.msra.mxu0 %v1776
    %1928 = vmatprep.subr.mxu0 %v1775
    %1929 = vmatpush1.msra.mxu0 %v1774
    %1930 = vmatprep.subr.mxu0 %v1773
    %1931 = vmatpush1.msra.mxu0 %v1772
    %1932 = vmatprep.subr.mxu0 %v1771
    %1933 = vmatpush1.msra.mxu0 %v1770
    %1934 = vmatprep.subr.mxu0 %v1769
    %1935 = vmatpush1.msra.mxu0 %v1768
    %1936 = vmatprep.subr.mxu0 %v1767
    %1937 = vmatpush1.msra.mxu0 %v1766
    %1938 = vmatprep.subr.mxu0 %v1829
    %1939 = vmatpush2.msra.mxu0 %v1828
    %1940 = vmatprep.subr.mxu0 %v1827
    %1941 = vmatpush2.msra.mxu0 %v1826
    %1942 = vmatprep.subr.mxu0 %v1825
    %1943 = vmatpush2.msra.mxu0 %v1824
    %1944 = vmatprep.subr.mxu0 %v1823
    %1945 = vmatpush2.msra.mxu0 %v1822
    %1946 = vmatprep.subr.mxu0 %v1821
    %1947 = vmatpush2.msra.mxu0 %v1820
    %1948 = vmatprep.subr.mxu0 %v1819
    %1949 = vmatpush2.msra.mxu0 %v1818
    %1950 = vmatprep.subr.mxu0 %v1817
    %1951 = vmatpush2.msra.mxu0 %v1816
    %1952 = vmatprep.subr.mxu0 %v1815
    %1953 = vmatpush2.msra.mxu0 %v1814
    %1954 = vmatprep.subr.mxu0 %v1813
    %1955 = vmatpush2.msra.mxu0 %v1812
    %1956 = vmatprep.subr.mxu0 %v1811
    %1957 = vmatpush2.msra.mxu0 %v1810
    %1958 = vmatprep.subr.mxu0 %v1809
    %1959 = vmatpush2.msra.mxu0 %v1808
    %1960 = vmatprep.subr.mxu0 %v1807
    %1961 = vmatpush2.msra.mxu0 %v1806
    %1962 = vmatprep.subr.mxu0 %v1805
    %1963 = vmatpush2.msra.mxu0 %v1804
    %1964 = vmatprep.subr.mxu0 %v1803
    %1965 = vmatpush2.msra.mxu0 %v1802
    %1966 = vmatprep.subr.mxu0 %v1801
    %1967 = vmatpush2.msra.mxu0 %v1800
    %1968 = vmatprep.subr.mxu0 %v1799
    %1969 = vmatpush2.msra.mxu0 %v1798
    %1970 = vmatprep.mubr.f32.mxu0 %v1763
    %1971 = vmatmul.mubr.f32.gmra.mxu0 %v1762
    %v1972 = vpop.f32.mrf.mxu0
    %v1973 = vadd.f32 %v1899, %v1972
    %v1974 = vpop.f32.mrf.mxu0
    %v1975 = vadd.f32 %v1903, %v1974
    %1976 = vdwg.mxu0
    %1977 = vmatprep.subr.mxu0 %v1861
    %1978 = vmatpush1.msra.mxu0 %v1860
    %1979 = vmatprep.subr.mxu0 %v1859
    %1980 = vmatpush1.msra.mxu0 %v1858
    %1981 = vmatprep.subr.mxu0 %v1857
    %1982 = vmatpush1.msra.mxu0 %v1856
    %1983 = vmatprep.subr.mxu0 %v1855
    %1984 = vmatpush1.msra.mxu0 %v1854
    %1985 = vmatprep.subr.mxu0 %v1853
    %1986 = vmatpush1.msra.mxu0 %v1852
    %1987 = vmatprep.subr.mxu0 %v1851
    %1988 = vmatpush1.msra.mxu0 %v1850
    %1989 = vmatprep.subr.mxu0 %v1849
    %1990 = vmatpush1.msra.mxu0 %v1848
    %1991 = vmatprep.subr.mxu0 %v1847
    %1992 = vmatpush1.msra.mxu0 %v1846
    %1993 = vmatprep.subr.mxu0 %v1845
    %1994 = vmatpush1.msra.mxu0 %v1844
    %1995 = vmatprep.subr.mxu0 %v1843
    %1996 = vmatpush1.msra.mxu0 %v1842
    %1997 = vmatprep.subr.mxu0 %v1841
    %1998 = vmatpush1.msra.mxu0 %v1840
    %1999 = vmatprep.subr.mxu0 %v1839
    %2000 = vmatpush1.msra.mxu0 %v1838
    %2001 = vmatprep.subr.mxu0 %v1837
    %2002 = vmatpush1.msra.mxu0 %v1836
    %2003 = vmatprep.subr.mxu0 %v1835
    %2004 = vmatpush1.msra.mxu0 %v1834
    %2005 = vmatprep.subr.mxu0 %v1833
    %2006 = vmatpush1.msra.mxu0 %v1832
    %2007 = vmatprep.subr.mxu0 %v1831
    %2008 = vmatpush1.msra.mxu0 %v1830
    %2009 = vmatprep.subr.mxu0 %v1893
    %2010 = vmatpush2.msra.mxu0 %v1892
    %2011 = vmatprep.subr.mxu0 %v1891
    %2012 = vmatpush2.msra.mxu0 %v1890
    %2013 = vmatprep.subr.mxu0 %v1889
    %2014 = vmatpush2.msra.mxu0 %v1888
    %2015 = vmatprep.subr.mxu0 %v1887
    %2016 = vmatpush2.msra.mxu0 %v1886
    %2017 = vmatprep.subr.mxu0 %v1885
    %2018 = vmatpush2.msra.mxu0 %v1884
    %2019 = vmatprep.subr.mxu0 %v1883
    %2020 = vmatpush2.msra.mxu0 %v1882
    %2021 = vmatprep.subr.mxu0 %v1881
    %2022 = vmatpush2.msra.mxu0 %v1880
    %2023 = vmatprep.subr.mxu0 %v1879
    %2024 = vmatpush2.msra.mxu0 %v1878
    %2025 = vmatprep.subr.mxu0 %v1877
    %2026 = vmatpush2.msra.mxu0 %v1876
    %2027 = vmatprep.subr.mxu0 %v1875
    %2028 = vmatpush2.msra.mxu0 %v1874
    %2029 = vmatprep.subr.mxu0 %v1873
    %2030 = vmatpush2.msra.mxu0 %v1872
    %2031 = vmatprep.subr.mxu0 %v1871
    %2032 = vmatpush2.msra.mxu0 %v1870
    %2033 = vmatprep.subr.mxu0 %v1869
    %2034 = vmatpush2.msra.mxu0 %v1868
    %2035 = vmatprep.subr.mxu0 %v1867
    %2036 = vmatpush2.msra.mxu0 %v1866
    %2037 = vmatprep.subr.mxu0 %v1865
    %2038 = vmatpush2.msra.mxu0 %v1864
    %2039 = vmatprep.subr.mxu0 %v1863
    %2040 = vmatpush2.msra.mxu0 %v1862
    %2041 = vmatprep.mubr.f32.mxu0 %v1765
    %2042 = vmatmul.mubr.f32.gmra.mxu0 %v1764
    %v2043 = vpop.f32.mrf.mxu0
    %v2044 = vadd.f32 %v1973, %v2043
    %v2045 = vpop.f32.mrf.mxu0
    %v2046 = vadd.f32 %v1975, %v2045
    %2047 = vdwg.mxu0
    %v2048 = vmax.f32 %v2044, 0.0
    %v2049 = vmax.f32 %v2046, 0.0
    %v2050 = vld [vmem:[%s5] sm:$0xff]
    %v2051 = vld [vmem:[%s5 + $0x8] sm:$0xff]
    %v2052 = vld [vmem:[%s5 + $0x10] sm:$0xff]
    %v2053 = vld [vmem:[%s5 + $0x18] sm:$0xff]
    %v2054 = vld [vmem:[%s5 + $0x20] sm:$0xff]
    %v2055 = vld [vmem:[%s5 + $0x28] sm:$0xff]
    %v2056 = vld [vmem:[%s5 + $0x30] sm:$0xff]
    %v2057 = vld [vmem:[%s5 + $0x38] sm:$0xff]
    %v2058 = vld [vmem:[%s5 + $0x40] sm:$0xff]
    %v2059 = vld [vmem:[%s5 + $0x48] sm:$0xff]
    %v2060 = vld [vmem:[%s5 + $0x50] sm:$0xff]
    %v2061 = vld [vmem:[%s5 + $0x58] sm:$0xff]
    %v2062 = vld [vmem:[%s5 + $0x60] sm:$0xff]
    %v2063 = vld [vmem:[%s5 + $0x68] sm:$0xff]
    %v2064 = vld [vmem:[%s5 + $0x70] sm:$0xff]
    %v2065 = vld [vmem:[%s5 + $0x78] sm:$0xff]
    %v2066 = vld [vmem:[%s5 + $0x80] sm:$0xff]
    %v2067 = vld [vmem:[%s5 + $0x88] sm:$0xff]
    %v2068 = vld [vmem:[%s5 + $0x90] sm:$0xff]
    %v2069 = vld [vmem:[%s5 + $0x98] sm:$0xff]
    %v2070 = vld [vmem:[%s5 + $0xa0] sm:$0xff]
    %v2071 = vld [vmem:[%s5 + $0xa8] sm:$0xff]
    %v2072 = vld [vmem:[%s5 + $0xb0] sm:$0xff]
    %v2073 = vld [vmem:[%s5 + $0xb8] sm:$0xff]
    %v2074 = vld [vmem:[%s5 + $0xc0] sm:$0xff]
    %v2075 = vld [vmem:[%s5 + $0xc8] sm:$0xff]
    %v2076 = vld [vmem:[%s5 + $0xd0] sm:$0xff]
    %v2077 = vld [vmem:[%s5 + $0xd8] sm:$0xff]
    %v2078 = vld [vmem:[%s5 + $0xe0] sm:$0xff]
    %v2079 = vld [vmem:[%s5 + $0xe8] sm:$0xff]
    %v2080 = vld [vmem:[%s5 + $0xf0] sm:$0xff]
    %v2081 = vld [vmem:[%s5 + $0xf8] sm:$0xff]
    %v2082 = vld [vmem:[#allocation11] sm:$0x1]
    %v2084 = vlaneseq
    %v2085 = vshrl.u32 %v2084, 7
    %v2086 = vsub.s32 0, %v2085
    %v2087 = vrot.slane %v2082, %v2086
    %2089 = vmatprep.subr.mxu0 0.0
    %2090 = vmatpush1.msra.mxu0 %v2065
    %2091 = vmatprep.subr.mxu0 0.0
    %2092 = vmatpush1.msra.mxu0 %v2064
    %2093 = vmatprep.subr.mxu0 0.0
    %2094 = vmatpush1.msra.mxu0 %v2063
    %2095 = vmatprep.subr.mxu0 0.0
    %2096 = vmatpush1.msra.mxu0 %v2062
    %2097 = vmatprep.subr.mxu0 0.0
    %2098 = vmatpush1.msra.mxu0 %v2061
    %2099 = vmatprep.subr.mxu0 0.0
    %2100 = vmatpush1.msra.mxu0 %v2060
    %2101 = vmatprep.subr.mxu0 0.0
    %2102 = vmatpush1.msra.mxu0 %v2059
    %2103 = vmatprep.subr.mxu0 0.0
    %2104 = vmatpush1.msra.mxu0 %v2058
    %2105 = vmatprep.subr.mxu0 0.0
    %2106 = vmatpush1.msra.mxu0 %v2057
    %2107 = vmatprep.subr.mxu0 0.0
    %2108 = vmatpush1.msra.mxu0 %v2056
    %2109 = vmatprep.subr.mxu0 0.0
    %2110 = vmatpush1.msra.mxu0 %v2055
    %2111 = vmatprep.subr.mxu0 0.0
    %2112 = vmatpush1.msra.mxu0 %v2054
    %2113 = vmatprep.subr.mxu0 0.0
    %2114 = vmatpush1.msra.mxu0 %v2053
    %2115 = vmatprep.subr.mxu0 0.0
    %2116 = vmatpush1.msra.mxu0 %v2052
    %2117 = vmatprep.subr.mxu0 0.0
    %2118 = vmatpush1.msra.mxu0 %v2051
    %2119 = vmatprep.subr.mxu0 0.0
    %2120 = vmatpush1.msra.mxu0 %v2050
    %2121 = vmatprep.subr.mxu0 0.0
    %2122 = vmatpush2.msra.mxu0 %v2081
    %2123 = vmatprep.subr.mxu0 0.0
    %2124 = vmatpush2.msra.mxu0 %v2080
    %2125 = vmatprep.subr.mxu0 0.0
    %2126 = vmatpush2.msra.mxu0 %v2079
    %2127 = vmatprep.subr.mxu0 0.0
    %2128 = vmatpush2.msra.mxu0 %v2078
    %2129 = vmatprep.subr.mxu0 0.0
    %2130 = vmatpush2.msra.mxu0 %v2077
    %2131 = vmatprep.subr.mxu0 0.0
    %2132 = vmatpush2.msra.mxu0 %v2076
    %2133 = vmatprep.subr.mxu0 0.0
    %2134 = vmatpush2.msra.mxu0 %v2075
    %2135 = vmatprep.subr.mxu0 0.0
    %2136 = vmatpush2.msra.mxu0 %v2074
    %2137 = vmatprep.subr.mxu0 0.0
    %2138 = vmatpush2.msra.mxu0 %v2073
    %2139 = vmatprep.subr.mxu0 0.0
    %2140 = vmatpush2.msra.mxu0 %v2072
    %2141 = vmatprep.subr.mxu0 0.0
    %2142 = vmatpush2.msra.mxu0 %v2071
    %2143 = vmatprep.subr.mxu0 0.0
    %2144 = vmatpush2.msra.mxu0 %v2070
    %2145 = vmatprep.subr.mxu0 0.0
    %2146 = vmatpush2.msra.mxu0 %v2069
    %2147 = vmatprep.subr.mxu0 0.0
    %2148 = vmatpush2.msra.mxu0 %v2068
    %2149 = vmatprep.subr.mxu0 0.0
    %2150 = vmatpush2.msra.mxu0 %v2067
    %2151 = vmatprep.subr.mxu0 0.0
    %2152 = vmatpush2.msra.mxu0 %v2066
    %2153 = vmatprep.mubr.f32.mxu0 %v2049
    %2154 = vmatmul.mubr.f32.gmra.mxu0 %v2048
    %v2155 = vpop.f32.mrf.mxu0
    %v2156 = vadd.f32 %v2087, %v2155
    %v2157 = vpop.f32.mrf.mxu0
    %2158 = vdwg.mxu0
    %v2159 = vmax.f32 %v2156, 0.0
    %v2160 = vld [vmem:[%s7] sm:$0xff]
    %v2161 = vld [vmem:[%s7 + $0x8] sm:$0xff]
    %v2162 = vld [vmem:[%s7 + $0x10] sm:$0xff]
    %v2163 = vld [vmem:[%s7 + $0x18] sm:$0xff]
    %v2164 = vld [vmem:[%s7 + $0x20] sm:$0xff]
    %v2165 = vld [vmem:[%s7 + $0x28] sm:$0xff]
    %v2166 = vld [vmem:[%s7 + $0x30] sm:$0xff]
    %v2167 = vld [vmem:[%s7 + $0x38] sm:$0xff]
    %v2168 = vld [vmem:[#allocation2] sm:$0x1]
    %v2170 = vlaneseq
    %v2171 = vshrl.u32 %v2170, 7
    %v2172 = vsub.s32 0, %v2171
    %v2173 = vrot.slane %v2168, %v2172
    %vm2175 = vcmask 523264
    %v2177 = vsel %vm2175, %v2159, 0
    %2179 = vmatprep.subr.mxu0 0.0
    %2180 = vmatpush1.msra.mxu0 0.0
    %2181 = vmatprep.subr.mxu0 0.0
    %2182 = vmatpush1.msra.mxu0 0.0
    %2183 = vmatprep.subr.mxu0 0.0
    %2184 = vmatpush1.msra.mxu0 0.0
    %2185 = vmatprep.subr.mxu0 0.0
    %2186 = vmatpush1.msra.mxu0 0.0
    %2187 = vmatprep.subr.mxu0 0.0
    %2188 = vmatpush1.msra.mxu0 0.0
    %2189 = vmatprep.subr.mxu0 0.0
    %2190 = vmatpush1.msra.mxu0 0.0
    %2191 = vmatprep.subr.mxu0 0.0
    %2192 = vmatpush1.msra.mxu0 0.0
    %2193 = vmatprep.subr.mxu0 0.0
    %2194 = vmatpush1.msra.mxu0 0.0
    %2195 = vmatprep.subr.mxu0 0.0
    %2196 = vmatpush1.msra.mxu0 %v2167
    %2197 = vmatprep.subr.mxu0 0.0
    %2198 = vmatpush1.msra.mxu0 %v2166
    %2199 = vmatprep.subr.mxu0 0.0
    %2200 = vmatpush1.msra.mxu0 %v2165
    %2201 = vmatprep.subr.mxu0 0.0
    %2202 = vmatpush1.msra.mxu0 %v2164
    %2203 = vmatprep.subr.mxu0 0.0
    %2204 = vmatpush1.msra.mxu0 %v2163
    %2205 = vmatprep.subr.mxu0 0.0
    %2206 = vmatpush1.msra.mxu0 %v2162
    %2207 = vmatprep.subr.mxu0 0.0
    %2208 = vmatpush1.msra.mxu0 %v2161
    %2209 = vmatprep.subr.mxu0 0.0
    %2210 = vmatpush1.msra.mxu0 %v2160
    %2211 = vmatprep.subr.mxu0 0.0
    %2212 = vmatpush2.msra.mxu0 0.0
    %2213 = vmatprep.subr.mxu0 0.0
    %2214 = vmatpush2.msra.mxu0 0.0
    %2215 = vmatprep.subr.mxu0 0.0
    %2216 = vmatpush2.msra.mxu0 0.0
    %2217 = vmatprep.subr.mxu0 0.0
    %2218 = vmatpush2.msra.mxu0 0.0
    %2219 = vmatprep.subr.mxu0 0.0
    %2220 = vmatpush2.msra.mxu0 0.0
    %2221 = vmatprep.subr.mxu0 0.0
    %2222 = vmatpush2.msra.mxu0 0.0
    %2223 = vmatprep.subr.mxu0 0.0
    %2224 = vmatpush2.msra.mxu0 0.0
    %2225 = vmatprep.subr.mxu0 0.0
    %2226 = vmatpush2.msra.mxu0 0.0
    %2227 = vmatprep.subr.mxu0 0.0
    %2228 = vmatpush2.msra.mxu0 0.0
    %2229 = vmatprep.subr.mxu0 0.0
    %2230 = vmatpush2.msra.mxu0 0.0
    %2231 = vmatprep.subr.mxu0 0.0
    %2232 = vmatpush2.msra.mxu0 0.0
    %2233 = vmatprep.subr.mxu0 0.0
    %2234 = vmatpush2.msra.mxu0 0.0
    %2235 = vmatprep.subr.mxu0 0.0
    %2236 = vmatpush2.msra.mxu0 0.0
    %2237 = vmatprep.subr.mxu0 0.0
    %2238 = vmatpush2.msra.mxu0 0.0
    %2239 = vmatprep.subr.mxu0 0.0
    %2240 = vmatpush2.msra.mxu0 0.0
    %2241 = vmatprep.subr.mxu0 0.0
    %2242 = vmatpush2.msra.mxu0 0.0
    %2243 = vmatprep.mubr.f32.mxu0 0.0
    %2244 = vmatmul.mubr.f32.gmra.mxu0 %v2177
    %v2245 = vpop.f32.mrf.mxu0
    %v2246 = vadd.f32 %v2173, %v2245
    %v2247 = vpop.f32.mrf.mxu0
    %2248 = vdwg.mxu0
    %v2249 = vmul.f32 %v2246, 0.5
    %v2250 = vtanh.pop %v2249
    %v2251 = vmul.f32 %v2250, 0.5
    %v2252 = vadd.f32 %v2251, 0.5
    %vm2253 = vcmask 7168
    %2254 = vst.msk [vmem:[%s9] sm:$0xff] %vm2253, %v2252
    // Predicated region
    $region62: #{tpu_custom_call.1} parent=1 // pred_check
      _
    $region63: #{tpu_custom_call.1} parent=1 // pred_check_branch
      %2256 = sbr.rel (0) target = $region65
    $region64: #{tpu_custom_call.1} parent=1 // pred_region
      _
    $region65: #{tpu_custom_call.1} parent=1 // pred_fallthru
      _
    // Predicated region
    $region66: #{tpu_custom_call.1} parent=1 // pred_check
      _
    $region67: #{tpu_custom_call.1} parent=1 // pred_check_branch
      %2258 = sbr.rel (0) target = $region69
    $region68: #{tpu_custom_call.1} parent=1 // pred_region
      _
    $region69: #{tpu_custom_call.1} parent=1 // pred_fallthru
      _
    %2259 = vsyncpa [#allocation4], 1
    %2260 = vsyncpa [#allocation6], 1
    %2261 = vsyncpa [#allocation9], 1
    %2262 = vsyncpa [#allocation12], 1

</llo_original>
